<compile_context>
chip_gen: v6e
topology: v6e:2x2x1
jax: 0.10.0
libtpu: 0.0.40
codegen_flags: <defaults>
</compile_context>

<pallas_src>
import jax
import jax.numpy as jnp
from jax.experimental import pallas as pl
from jax.experimental.pallas import tpu as pltpu


def _round_up(n: int, m: int) -> int:
    return ((n + m - 1) // m) * m


def _linear_kernel(x_ref, w_ref, b_ref, o_ref):
    # x_ref: (B, Lp) full-K block (resident; constant index_map)
    # w_ref: (Lp, TN)   b_ref: (1, TN)   o_ref: (B, TN)
    o_ref[...] = (
        jnp.dot(x_ref[...], w_ref[...], preferred_element_type=jnp.float32)
        + b_ref[...]
    ).astype(o_ref.dtype)


def init_weights(key, L):
    """BaseModel.init_weights: uniform(-0.08, 0.08) for every parameter."""
    kw, kb = jax.random.split(key)
    w = jax.random.uniform(kw, (L, L), jnp.float32, minval=-0.08, maxval=0.08)
    b = jax.random.uniform(kb, (L,), jnp.float32, minval=-0.08, maxval=0.08)
    return w, b


def prepare_params(w, b):
    """One-time (init-time) pad of parameters to lane-dense 128-multiples.

    Done outside the forward so the 4 MiB weight copy is never paid per call.
    """
    L = w.shape[0]
    assert w.shape == (L, L) and b.shape == (L,)
    Lp = _round_up(L, 128)
    pad = Lp - L
    if pad:
        w = jnp.pad(w, ((0, pad), (0, pad)))
        b = jnp.pad(b, (0, pad))
    return w, b.reshape(1, Lp)


def base_model_forward(x, w_p, b_p, *, tn_target=512):
    """p = x @ W + b with pre-padded params (w_p: (Lp,Lp), b_p: (1,Lp)).

    x: (B, L) float32.  Returns p: (B, L) float32.
    """
    B, L = x.shape
    Lp = w_p.shape[0]
    assert w_p.shape == (Lp, Lp) and b_p.shape == (1, Lp) and Lp >= L

    # Only x (tiny: B x pad floats) is padded per call; zeros contribute 0.
    if Lp != L:
        x = jnp.pad(x, ((0, 0), (0, Lp - L)))

    # Large lane-dense N tiles; tn must divide Lp (Lp is a 128-multiple).
    tn = next(t for t in (tn_target, 512, 256, 128) if Lp % t == 0)
    grid = (Lp // tn,)  # e.g. (2,) for Lp=1024, tn=512

    cost = pl.CostEstimate(
        flops=2 * B * Lp * Lp,
        transcendentals=0,
        bytes_accessed=4 * (Lp * Lp + 2 * B * Lp + Lp),
    )

    out_p = pl.pallas_call(
        _linear_kernel,
        out_shape=jax.ShapeDtypeStruct((B, Lp), x.dtype),
        grid=grid,
        in_specs=[
            # x: full block, constant index -> DMA'd once, stays resident.
            pl.BlockSpec((B, Lp), lambda j: (0, 0)),
            # W: stream (Lp, tn) column blocks (the only real HBM traffic).
            pl.BlockSpec((Lp, tn), lambda j: (0, j)),
            # bias: matching (1, tn) blocks.
            pl.BlockSpec((1, tn), lambda j: (0, j)),
        ],
        out_specs=pl.BlockSpec((B, tn), lambda j: (0, j)),
        compiler_params=pltpu.CompilerParams(
            dimension_semantics=("parallel",),  # megacore split on v7x
        ),
        cost_estimate=cost,
    )(x, w_p, b_p)

    return out_p[:, :L]


# TODO(synk): calculate_loss, optimizer/scheduler construction, AMP GradScaler,
# SAM, grad clipping, and checkpoint save/load are training-infrastructure /
# abstract methods with no forward-pass compute to express as a kernel.

if __name__ == "__main__":
    key = jax.random.PRNGKey(0)
    kx, kp = jax.random.split(key)

    # Shapes from the class contract: dummy batch x = randn([16, 1000]).
    # Exercises the one-time pad-to-1024 / per-call slice-back path.
    B, L = 16, 1000
    x = jax.random.normal(kx, (B, L), jnp.float32)
    w, b = init_weights(kp, L)
    w_p, b_p = prepare_params(w, b)  # one-time, outside the forward path

    p = base_model_forward(x, w_p, b_p)
    jax.block_until_ready(p)

    # sanity check vs. plain JAX reference (full-precision matmul)
    ref = jnp.dot(x, w, precision=jax.lax.Precision.HIGHEST) + b
    assert p.shape == (B, L)
    err = float(jnp.max(jnp.abs(p - ref)))
    assert jnp.allclose(p, ref, atol=5e-3, rtol=5e-3), err

    print("KERNEL_OK")
</pallas_src>

<mosaic_0001>
module attributes {stable_mosaic.version = 11 : i64} {
  func.func @_linear_kernel(%arg0: i32, %arg1: memref<16x1024xf32, #tpu.memory_space<vmem>>, %arg2: memref<1024x512xf32, #tpu.memory_space<vmem>>, %arg3: memref<1x512xf32, #tpu.memory_space<vmem>>, %arg4: memref<16x512xf32, #tpu.memory_space<vmem>>) attributes {dimension_semantics = [#tpu.dimension_semantics<parallel>], iteration_bounds = array<i64: 2>, scalar_prefetch = 0 : i64, scratch_operands = 0 : i64, tpu.core_type = #tpu.core_type<tc>, window_params = [{pipeline_mode = #tpu.pipeline_mode<synchronous>, transform_indices = @transform_0, window_bounds = array<i64: 16, 1024>}, {transform_indices = @transform_1, window_bounds = array<i64: 1024, 512>}, {transform_indices = @transform_2, window_bounds = array<i64: 1, 512>}, {transform_indices = @transform_3, window_bounds = array<i64: 16, 512>}]} {
    %c0 = arith.constant 0 : index
    %c0_0 = arith.constant 0 : index
    %0 = vector.load %arg1[%c0, %c0_0] : memref<16x1024xf32, #tpu.memory_space<vmem>>, vector<16x1024xf32>
    %c0_1 = arith.constant 0 : index
    %c0_2 = arith.constant 0 : index
    %1 = vector.load %arg2[%c0_1, %c0_2] : memref<1024x512xf32, #tpu.memory_space<vmem>>, vector<1024x512xf32>
    %cst = arith.constant dense<0.000000e+00> : vector<16x512xf32>
    %2 = tpu.matmul %0, %1, %cst {dimension_numbers = #tpu.dot_dimension_numbers<[1], [0], [0], [1], [0, 0, 1, 1], [], []>} : vector<16x1024xf32>, vector<1024x512xf32>, vector<16x512xf32> -> vector<16x512xf32>
    %c0_3 = arith.constant 0 : index
    %c0_4 = arith.constant 0 : index
    %3 = vector.load %arg3[%c0_3, %c0_4] : memref<1x512xf32, #tpu.memory_space<vmem>>, vector<1x512xf32>
    %4 = vector.broadcast %3 : vector<1x512xf32> to vector<16x512xf32>
    %5 = arith.addf %2, %4 : vector<16x512xf32>
    %c0_5 = arith.constant 0 : index
    %c0_6 = arith.constant 0 : index
    %6 = vector.load %arg4[%c0_5, %c0_6] : memref<16x512xf32, #tpu.memory_space<vmem>>, vector<16x512xf32>
    tpu.vector_store %arg4[%c0_5, %c0_6], %5 {strides = array<i32>} : memref<16x512xf32, #tpu.memory_space<vmem>>, vector<16x512xf32>,
    return
  }
  func.func @transform_0(%arg0: i32) -> (i32, i32) {
    %c0_i32 = arith.constant 0 : i32
    %c0_i32_0 = arith.constant 0 : i32
    %c0_i32_1 = arith.constant 0 : i32
    return %c0_i32, %c0_i32_0 : i32, i32
  }
  func.func @transform_1(%arg0: i32) -> (i32, i32) {
    %c0_i32 = arith.constant 0 : i32
    %c0_i32_0 = arith.constant 0 : i32
    return %c0_i32, %arg0 : i32, i32
  }
  func.func @transform_2(%arg0: i32) -> (i32, i32) {
    %c0_i32 = arith.constant 0 : i32
    %c0_i32_0 = arith.constant 0 : i32
    return %c0_i32, %arg0 : i32, i32
  }
  func.func @transform_3(%arg0: i32) -> (i32, i32) {
    %c0_i32 = arith.constant 0 : i32
    %c0_i32_0 = arith.constant 0 : i32
    return %c0_i32, %arg0 : i32, i32
  }
}

</mosaic_0001>

<llo_original>
// kernel: tpu_custom_call.1
$region0: #{tpu_custom_call.1}
  #allocation0 [shape = 'u32[]', space=smem, size = 0x4, offset = 0x4, fixed_abs, tag = 'smem constant byte address 0x4 - core index']
  #allocation1 [shape = 'u32[144,128]{1,0:T(1,128)}', space=vmem, size = 0x12000, scoped, tag = 'internal scratch']
  %s0 = inlined_call_operand.hbm [shape: f32[16,1024], index: 0, kind: input, shape index: {}]
  %s1 = inlined_call_operand.hbm [shape: f32[1024,1024], index: 1, kind: input, shape index: {}]
  %s2 = inlined_call_operand.hbm [shape: f32[1,1024], index: 2, kind: input, shape index: {}]
  %s3 = inlined_call_operand.hbm [shape: f32[16,1024], index: 3, kind: output, shape index: {}]
  %s4 = sld [smem:[#allocation0]]
  $region57: #{tpu_custom_call.1} parent=0
    _
  %s6 = ssub.s32 1, %s4
  %s7 = scalar_select 0, %s6, %s4
  $region1: #{tpu_custom_call.1} parent=0
    #allocation2 [shape = 'u8[65536]{0}', space=vmem, size = 0x10000, scoped, tag = 'input window, operand 0, single buffered']
    #allocation3 [shape = 's32[2]{0}', space=sflag, size = 0x8, scoped, tag = 'scoped memory for tpu_custom_call.1']
    #allocation4 [shape = 's32[2]{0}', space=sflag, size = 0x8, scoped, tag = 'scoped memory for tpu_custom_call.1']
    #allocation5 [shape = 'u8[4194304]{0}', space=vmem, size = 0x400000, scoped, tag = 'input window, operand 1']
    #allocation6 [shape = 's32[2]{0}', space=sflag, size = 0x8, scoped, tag = 'scoped memory for tpu_custom_call.1']
    #allocation7 [shape = 'u8[4096]{0}', space=vmem, size = 0x1000, scoped, tag = 'input window, operand 2']
    #allocation8 [shape = 'u8[65536]{0}', space=vmem, size = 0x10000, scoped, tag = 'output window, operand 0']
    %8 = vsyncpa [#allocation3], 0
    %9 = vsyncpa [#allocation6], 0
    %s10 = scalar_lea.sflag [#allocation6], 1
    %11 = vsyncpa %s10, 0
    %12 = vsyncpa [#allocation4], 0
    %s13 = scalar_lea.sflag [#allocation4], 1
    %14 = vsyncpa %s13, 0
    loop: start=0, step=1, limit=4
    $region2: #{tpu_custom_call.1} parent=1 // loop_pre_header
      _
    $region3: #{tpu_custom_call.1} parent=1 // loop_header
      %s16 = sphi 0, %s20
      %p17 = scmp.ge.s32.totalorder %s16, 4
      %s24 = sphi 0, %s24
      %s26 = sphi 0, %s24
      %s27 = sphi 0, %s26
      %s41 = sphi 0, %s27
      %s47 = sphi 0, %s49
      %s50 = sphi 0, %s47
      %s51 = sphi 0, %s50
      %s67 = sphi 0, %s51
      %s73 = sphi 0, %s75
      %s76 = sphi 0, %s73
      %s77 = sphi 0, %s76
      %s93 = sphi 0, %s77
      %s99 = sphi 0, %s101
      %s102 = sphi 0, %s99
      %s103 = sphi 0, %s102
      %s119 = sphi 0, %s103
    $region4: #{tpu_custom_call.1} parent=1 // loop_header_branch
      %19 = sbr.rel (%p17) target = $region8
    $region5: #{tpu_custom_call.1} parent=1 // loop_body
      %s21 = ssub.s32 %s16, 1
      %s22 = ssub.s32 %s16, 2
      %s23 = sadd.s32 %s16, 1
      %s25 = sadd.s32 %s24, 1
      %p28 = scmp.eq.s32.totalorder %s16, 1
      %p29 = scmp.ne.s32.totalorder %s24, %s26
      %p30 = scmp.eq.s32.totalorder %s16, 0
      %p31 = por %p29, %p30
      %p32 = scmp.ne.s32.totalorder %s24, %s26
      %p33 = scmp.eq.s32.totalorder %s21, 1
      %p34 = por %p32, %p33
      %p35 = scmp.ne.s32.totalorder %s26, %s27
      %p36 = scmp.eq.s32.totalorder %s21, 0
      %p37 = por %p35, %p36
      %p38 = scmp.ne.s32.totalorder %s26, %s27
      %p39 = scmp.eq.s32.totalorder %s22, 1
      %p40 = por %p38, %p39
      %p42 = scmp.ne.s32.totalorder %s27, %s41
      %p43 = scmp.eq.s32.totalorder %s22, 0
      %p44 = por %p42, %p43
      %s45 = ssub.s32 %s16, %s23
      %p46 = scmp.eq.s32.totalorder %s45, 0
      %s48 = sadd.s32 %s47, 1
      %s49 = scalar_select %p46, %s47, %s48
      %p52 = pneg %p46
      %p53 = scmp.eq.s32.totalorder %s16, 1
      %p54 = por %p52, %p53
      %p55 = scmp.ne.s32.totalorder %s47, %s50
      %p56 = scmp.eq.s32.totalorder %s16, 0
      %p57 = por %p55, %p56
      %p58 = scmp.ne.s32.totalorder %s47, %s50
      %p59 = scmp.eq.s32.totalorder %s21, 1
      %p60 = por %p58, %p59
      %p61 = scmp.ne.s32.totalorder %s50, %s51
      %p62 = scmp.eq.s32.totalorder %s21, 0
      %p63 = por %p61, %p62
      %p64 = scmp.ne.s32.totalorder %s50, %s51
      %p65 = scmp.eq.s32.totalorder %s22, 1
      %p66 = por %p64, %p65
      %p68 = scmp.ne.s32.totalorder %s51, %s67
      %p69 = scmp.eq.s32.totalorder %s22, 0
      %p70 = por %p68, %p69
      %s71 = ssub.s32 %s16, %s23
      %p72 = scmp.eq.s32.totalorder %s71, 0
      %s74 = sadd.s32 %s73, 1
      %s75 = scalar_select %p72, %s73, %s74
      %p78 = pneg %p72
      %p79 = scmp.eq.s32.totalorder %s16, 1
      %p80 = por %p78, %p79
      %p81 = scmp.ne.s32.totalorder %s73, %s76
      %p82 = scmp.eq.s32.totalorder %s16, 0
      %p83 = por %p81, %p82
      %p84 = scmp.ne.s32.totalorder %s73, %s76
      %p85 = scmp.eq.s32.totalorder %s21, 1
      %p86 = por %p84, %p85
      %p87 = scmp.ne.s32.totalorder %s76, %s77
      %p88 = scmp.eq.s32.totalorder %s21, 0
      %p89 = por %p87, %p88
      %p90 = scmp.ne.s32.totalorder %s76, %s77
      %p91 = scmp.eq.s32.totalorder %s22, 1
      %p92 = por %p90, %p91
      %p94 = scmp.ne.s32.totalorder %s77, %s93
      %p95 = scmp.eq.s32.totalorder %s22, 0
      %p96 = por %p94, %p95
      %s97 = ssub.s32 %s16, %s23
      %p98 = scmp.eq.s32.totalorder %s97, 0
      %s100 = sadd.s32 %s99, 1
      %s101 = scalar_select %p98, %s99, %s100
      %p104 = pneg %p98
      %p105 = scmp.eq.s32.totalorder %s16, 1
      %p106 = por %p104, %p105
      %p107 = scmp.ne.s32.totalorder %s99, %s102
      %p108 = scmp.eq.s32.totalorder %s16, 0
      %p109 = por %p107, %p108
      %p110 = scmp.ne.s32.totalorder %s99, %s102
      %p111 = scmp.eq.s32.totalorder %s21, 1
      %p112 = por %p110, %p111
      %p113 = scmp.ne.s32.totalorder %s102, %s103
      %p114 = scmp.eq.s32.totalorder %s21, 0
      %p115 = por %p113, %p114
      %p116 = scmp.ne.s32.totalorder %s102, %s103
      %p117 = scmp.eq.s32.totalorder %s22, 1
      %p118 = por %p116, %p117
      %p120 = scmp.ne.s32.totalorder %s103, %s119
      %p121 = scmp.eq.s32.totalorder %s22, 0
      %p122 = por %p120, %p121
      %p123 = scmp.le.s32.totalorder 1, %s16
      %p124 = scmp.lt.s32.totalorder %s16, 3
      %p125 = pnand %p123, %p124
      %p126 = pneg %p125
      // Predicated region
      $region9: #{tpu_custom_call.1} parent=5 // pred_check
        _
      $region10: #{tpu_custom_call.1} parent=5 // pred_check_branch
        %128 = sbr.rel (%p125) target = $region12
      $region11: #{tpu_custom_call.1} parent=5 // pred_region
        %s129 = ssub.s32 %s16, 1
        // Predicated region
        $region13: #{tpu_custom_call.1} parent=11 // pred_check
          %p130 = pneg %p37
        $region14: #{tpu_custom_call.1} parent=11 // pred_check_branch
          %132 = sbr.rel (%p130) target = $region16
        $region15: #{tpu_custom_call.1} parent=11 // pred_region
          %s134 = ssub.s32 2048, 2048
          %135 = vsyncadd [#allocation3], %s134
          %s136 = sshll.u32 [#allocation2], 4
          %s137 = int_to_ptr.vmem [resolvable:$true] %s136
          %142 = dma.hbm_to_vmem [thread:$0]  %s0, 2048, %s137, [#allocation3], 1024, 1024, 64
        $region16: #{tpu_custom_call.1} parent=11 // pred_fallthru
          _
      $region12: #{tpu_custom_call.1} parent=5 // pred_fallthru
        _
      %p143 = scmp.lt.s32.totalorder %s16, 2
      // Predicated region
      $region17: #{tpu_custom_call.1} parent=5 // pred_check
        %p144 = pneg %p143
      $region18: #{tpu_custom_call.1} parent=5 // pred_check_branch
        %146 = sbr.rel (%p144) target = $region20
      $region19: #{tpu_custom_call.1} parent=5 // pred_region
        // Predicated region
        $region21: #{tpu_custom_call.1} parent=19 // pred_check
          %p147 = pneg %p57
        $region22: #{tpu_custom_call.1} parent=19 // pred_check_branch
          %149 = sbr.rel (%p147) target = $region24
        $region23: #{tpu_custom_call.1} parent=19 // pred_region
          %s150 = sand.u32 %s16, 1
          %s151 = scalar_lea.sflag [#allocation6], %s150
          %s152 = sand.u32 %s47, 1
          %s153 = smul.addr %s152, 4096
          %s154 = scalar_lea.vmem [#allocation5], %s153
          %s155 = smul.u32 4, %s16
          %s157 = ssub.s32 65536, 65536
          %158 = vsyncadd %s151, %s157
          %s159 = smul.addr %s155, 128
          %s160 = scalar_lea.hbm %s1, %s159
          %s161 = sshll.u32 %s154, 4
          %s162 = int_to_ptr.vmem [resolvable:$true] %s161
          %167 = dma.hbm_to_vmem [thread:$0]  %s160, 65536, %s162, %s151, 1024, 512, 32
        $region24: #{tpu_custom_call.1} parent=19 // pred_fallthru
          _
        // Predicated region
        $region25: #{tpu_custom_call.1} parent=19 // pred_check
          %p168 = pneg %p83
        $region26: #{tpu_custom_call.1} parent=19 // pred_check_branch
          %170 = sbr.rel (%p168) target = $region28
        $region27: #{tpu_custom_call.1} parent=19 // pred_region
          %s171 = sand.u32 %s16, 1
          %s172 = scalar_lea.sflag [#allocation6], %s171
          %s173 = sand.u32 %s73, 1
          %s174 = smul.addr %s173, 4
          %s175 = scalar_lea.vmem [#allocation7], %s174
          %s176 = smul.u32 4, %s16
          %s178 = ssub.s32 64, 64
          %179 = vsyncadd %s172, %s178
          %s180 = smul.addr %s176, 16
          %s181 = scalar_lea.hbm %s2, %s180
          %s183 = sshll.u32 %s175, 4
          %s184 = int_to_ptr.vmem [resolvable:$true] %s183
          %186 = dma.hbm_to_vmem [thread:$0]  %s181, 64, %s184, %s172
        $region28: #{tpu_custom_call.1} parent=19 // pred_fallthru
          _
      $region20: #{tpu_custom_call.1} parent=5 // pred_fallthru
        _
      %p187 = scmp.le.s32.totalorder 1, %s16
      %p188 = scmp.lt.s32.totalorder %s16, 3
      %p189 = pnand %p187, %p188
      %p190 = pneg %p189
      // Predicated region
      $region29: #{tpu_custom_call.1} parent=5 // pred_check
        _
      $region30: #{tpu_custom_call.1} parent=5 // pred_check_branch
        %192 = sbr.rel (%p189) target = $region32
      $region31: #{tpu_custom_call.1} parent=5 // pred_region
        %s193 = ssub.s32 %s16, 1
        // Predicated region
        $region33: #{tpu_custom_call.1} parent=31 // pred_check
          %p194 = pneg %p37
        $region34: #{tpu_custom_call.1} parent=31 // pred_check_branch
          %196 = sbr.rel (%p194) target = $region36
        $region35: #{tpu_custom_call.1} parent=31 // pred_region
          %197 = dma.done [#allocation3], 2048
        $region36: #{tpu_custom_call.1} parent=31 // pred_fallthru
          _
        %s198 = sand.u32 %s21, 1
        %s199 = scalar_lea.sflag [#allocation6], %s198
        %s200 = sand.u32 %s50, 1
        %s201 = smul.addr %s200, 4096
        %s202 = scalar_lea.vmem [#allocation5], %s201
        // Predicated region
        $region37: #{tpu_custom_call.1} parent=31 // pred_check
          %p203 = pneg %p63
        $region38: #{tpu_custom_call.1} parent=31 // pred_check_branch
          %205 = sbr.rel (%p203) target = $region40
        $region39: #{tpu_custom_call.1} parent=31 // pred_region
          %206 = dma.done %s199, 65536
        $region40: #{tpu_custom_call.1} parent=31 // pred_fallthru
          _
        %s207 = sand.u32 %s21, 1
        %s208 = scalar_lea.sflag [#allocation6], %s207
        %s209 = sand.u32 %s76, 1
        %s210 = smul.addr %s209, 4
        %s211 = scalar_lea.vmem [#allocation7], %s210
        // Predicated region
        $region41: #{tpu_custom_call.1} parent=31 // pred_check
          %p212 = pneg %p89
        $region42: #{tpu_custom_call.1} parent=31 // pred_check_branch
          %214 = sbr.rel (%p212) target = $region44
        $region43: #{tpu_custom_call.1} parent=31 // pred_region
          %215 = dma.done %s208, 64
        $region44: #{tpu_custom_call.1} parent=31 // pred_fallthru
          _
        %p216 = pneg %p37
        %p217 = pneg %p34
        %s218 = sand.u32 %s21, 1
        %s219 = scalar_lea.sflag [#allocation6], %s218
        %s220 = sand.u32 %s50, 1
        %s221 = smul.addr %s220, 4096
        %s222 = scalar_lea.vmem [#allocation5], %s221
        %p223 = pneg %p63
        %p224 = pneg %p60
        %s225 = sand.u32 %s21, 1
        %s226 = scalar_lea.sflag [#allocation6], %s225
        %s227 = sand.u32 %s76, 1
        %s228 = smul.addr %s227, 4
        %s229 = scalar_lea.vmem [#allocation7], %s228
        %p230 = pneg %p89
        %p231 = pneg %p86
        %p232 = pneg %p115
        %p233 = pneg %p112
        %s234 = sand.u32 %s102, 1
        %s235 = scalar_lea.sflag [#allocation4], %s234
        %s236 = sand.u32 %s102, 1
        %s237 = smul.addr %s236, 64
        %s238 = scalar_lea.vmem [#allocation8], %s237
        %s239 = smul.u32 4, %s21
        %s240 = smul.u32 4, %s21
        %s241 = smul.u32 4, %s21
        %v242 = vld [vmem:[#allocation2] sm:$0xff]
        %v243 = vld [vmem:[#allocation2 + $0x8] sm:$0xff]
        %v244 = vld [vmem:[#allocation2 + $0x10] sm:$0xff]
        %v245 = vld [vmem:[#allocation2 + $0x18] sm:$0xff]
        %v246 = vld [vmem:[#allocation2 + $0x20] sm:$0xff]
        %v247 = vld [vmem:[#allocation2 + $0x28] sm:$0xff]
        %v248 = vld [vmem:[#allocation2 + $0x30] sm:$0xff]
        %v249 = vld [vmem:[#allocation2 + $0x38] sm:$0xff]
        %v250 = vld [vmem:[#allocation2 + $0x40] sm:$0xff]
        %v251 = vld [vmem:[#allocation2 + $0x48] sm:$0xff]
        %v252 = vld [vmem:[#allocation2 + $0x50] sm:$0xff]
        %v253 = vld [vmem:[#allocation2 + $0x58] sm:$0xff]
        %v254 = vld [vmem:[#allocation2 + $0x60] sm:$0xff]
        %v255 = vld [vmem:[#allocation2 + $0x68] sm:$0xff]
        %v256 = vld [vmem:[#allocation2 + $0x70] sm:$0xff]
        %v257 = vld [vmem:[#allocation2 + $0x78] sm:$0xff]
        %v258 = vld [vmem:[%s202] sm:$0xff]
        %v259 = vld [vmem:[%s202 + $0x8] sm:$0xff]
        %v260 = vld [vmem:[%s202 + $0x10] sm:$0xff]
        %v261 = vld [vmem:[%s202 + $0x18] sm:$0xff]
        %v262 = vld [vmem:[%s202 + $0x20] sm:$0xff]
        %v263 = vld [vmem:[%s202 + $0x28] sm:$0xff]
        %v264 = vld [vmem:[%s202 + $0x30] sm:$0xff]
        %v265 = vld [vmem:[%s202 + $0x38] sm:$0xff]
        %v266 = vld [vmem:[%s202 + $0x40] sm:$0xff]
        %v267 = vld [vmem:[%s202 + $0x48] sm:$0xff]
        %v268 = vld [vmem:[%s202 + $0x50] sm:$0xff]
        %v269 = vld [vmem:[%s202 + $0x58] sm:$0xff]
        %v270 = vld [vmem:[%s202 + $0x60] sm:$0xff]
        %v271 = vld [vmem:[%s202 + $0x68] sm:$0xff]
        %v272 = vld [vmem:[%s202 + $0x70] sm:$0xff]
        %v273 = vld [vmem:[%s202 + $0x78] sm:$0xff]
        %v274 = vld [vmem:[%s202 + $0x80] sm:$0xff]
        %v275 = vld [vmem:[%s202 + $0x88] sm:$0xff]
        %v276 = vld [vmem:[%s202 + $0x90] sm:$0xff]
        %v277 = vld [vmem:[%s202 + $0x98] sm:$0xff]
        %v278 = vld [vmem:[%s202 + $0xa0] sm:$0xff]
        %v279 = vld [vmem:[%s202 + $0xa8] sm:$0xff]
        %v280 = vld [vmem:[%s202 + $0xb0] sm:$0xff]
        %v281 = vld [vmem:[%s202 + $0xb8] sm:$0xff]
        %v282 = vld [vmem:[%s202 + $0xc0] sm:$0xff]
        %v283 = vld [vmem:[%s202 + $0xc8] sm:$0xff]
        %v284 = vld [vmem:[%s202 + $0xd0] sm:$0xff]
        %v285 = vld [vmem:[%s202 + $0xd8] sm:$0xff]
        %v286 = vld [vmem:[%s202 + $0xe0] sm:$0xff]
        %v287 = vld [vmem:[%s202 + $0xe8] sm:$0xff]
        %v288 = vld [vmem:[%s202 + $0xf0] sm:$0xff]
        %v289 = vld [vmem:[%s202 + $0xf8] sm:$0xff]
        %v290 = vld [vmem:[%s202 + $0x100] sm:$0xff]
        %v291 = vld [vmem:[%s202 + $0x108] sm:$0xff]
        %v292 = vld [vmem:[%s202 + $0x110] sm:$0xff]
        %v293 = vld [vmem:[%s202 + $0x118] sm:$0xff]
        %v294 = vld [vmem:[%s202 + $0x120] sm:$0xff]
        %v295 = vld [vmem:[%s202 + $0x128] sm:$0xff]
        %v296 = vld [vmem:[%s202 + $0x130] sm:$0xff]
        %v297 = vld [vmem:[%s202 + $0x138] sm:$0xff]
        %v298 = vld [vmem:[%s202 + $0x140] sm:$0xff]
        %v299 = vld [vmem:[%s202 + $0x148] sm:$0xff]
        %v300 = vld [vmem:[%s202 + $0x150] sm:$0xff]
        %v301 = vld [vmem:[%s202 + $0x158] sm:$0xff]
        %v302 = vld [vmem:[%s202 + $0x160] sm:$0xff]
        %v303 = vld [vmem:[%s202 + $0x168] sm:$0xff]
        %v304 = vld [vmem:[%s202 + $0x170] sm:$0xff]
        %v305 = vld [vmem:[%s202 + $0x178] sm:$0xff]
        %v306 = vld [vmem:[%s202 + $0x180] sm:$0xff]
        %v307 = vld [vmem:[%s202 + $0x188] sm:$0xff]
        %v308 = vld [vmem:[%s202 + $0x190] sm:$0xff]
        %v309 = vld [vmem:[%s202 + $0x198] sm:$0xff]
        %v310 = vld [vmem:[%s202 + $0x1a0] sm:$0xff]
        %v311 = vld [vmem:[%s202 + $0x1a8] sm:$0xff]
        %v312 = vld [vmem:[%s202 + $0x1b0] sm:$0xff]
        %v313 = vld [vmem:[%s202 + $0x1b8] sm:$0xff]
        %v314 = vld [vmem:[%s202 + $0x1c0] sm:$0xff]
        %v315 = vld [vmem:[%s202 + $0x1c8] sm:$0xff]
        %v316 = vld [vmem:[%s202 + $0x1d0] sm:$0xff]
        %v317 = vld [vmem:[%s202 + $0x1d8] sm:$0xff]
        %v318 = vld [vmem:[%s202 + $0x1e0] sm:$0xff]
        %v319 = vld [vmem:[%s202 + $0x1e8] sm:$0xff]
        %v320 = vld [vmem:[%s202 + $0x1f0] sm:$0xff]
        %v321 = vld [vmem:[%s202 + $0x1f8] sm:$0xff]
        %v322 = vld [vmem:[%s202 + $0x200] sm:$0xff]
        %v323 = vld [vmem:[%s202 + $0x208] sm:$0xff]
        %v324 = vld [vmem:[%s202 + $0x210] sm:$0xff]
        %v325 = vld [vmem:[%s202 + $0x218] sm:$0xff]
        %v326 = vld [vmem:[%s202 + $0x220] sm:$0xff]
        %v327 = vld [vmem:[%s202 + $0x228] sm:$0xff]
        %v328 = vld [vmem:[%s202 + $0x230] sm:$0xff]
        %v329 = vld [vmem:[%s202 + $0x238] sm:$0xff]
        %v330 = vld [vmem:[%s202 + $0x240] sm:$0xff]
        %v331 = vld [vmem:[%s202 + $0x248] sm:$0xff]
        %v332 = vld [vmem:[%s202 + $0x250] sm:$0xff]
        %v333 = vld [vmem:[%s202 + $0x258] sm:$0xff]
        %v334 = vld [vmem:[%s202 + $0x260] sm:$0xff]
        %v335 = vld [vmem:[%s202 + $0x268] sm:$0xff]
        %v336 = vld [vmem:[%s202 + $0x270] sm:$0xff]
        %v337 = vld [vmem:[%s202 + $0x278] sm:$0xff]
        %v338 = vld [vmem:[%s202 + $0x280] sm:$0xff]
        %v339 = vld [vmem:[%s202 + $0x288] sm:$0xff]
        %v340 = vld [vmem:[%s202 + $0x290] sm:$0xff]
        %v341 = vld [vmem:[%s202 + $0x298] sm:$0xff]
        %v342 = vld [vmem:[%s202 + $0x2a0] sm:$0xff]
        %v343 = vld [vmem:[%s202 + $0x2a8] sm:$0xff]
        %v344 = vld [vmem:[%s202 + $0x2b0] sm:$0xff]
        %v345 = vld [vmem:[%s202 + $0x2b8] sm:$0xff]
        %v346 = vld [vmem:[%s202 + $0x2c0] sm:$0xff]
        %v347 = vld [vmem:[%s202 + $0x2c8] sm:$0xff]
        %v348 = vld [vmem:[%s202 + $0x2d0] sm:$0xff]
        %v349 = vld [vmem:[%s202 + $0x2d8] sm:$0xff]
        %v350 = vld [vmem:[%s202 + $0x2e0] sm:$0xff]
        %v351 = vld [vmem:[%s202 + $0x2e8] sm:$0xff]
        %v352 = vld [vmem:[%s202 + $0x2f0] sm:$0xff]
        %v353 = vld [vmem:[%s202 + $0x2f8] sm:$0xff]
        %v354 = vld [vmem:[%s202 + $0x300] sm:$0xff]
        %v355 = vld [vmem:[%s202 + $0x308] sm:$0xff]
        %v356 = vld [vmem:[%s202 + $0x310] sm:$0xff]
        %v357 = vld [vmem:[%s202 + $0x318] sm:$0xff]
        %v358 = vld [vmem:[%s202 + $0x320] sm:$0xff]
        %v359 = vld [vmem:[%s202 + $0x328] sm:$0xff]
        %v360 = vld [vmem:[%s202 + $0x330] sm:$0xff]
        %v361 = vld [vmem:[%s202 + $0x338] sm:$0xff]
        %v362 = vld [vmem:[%s202 + $0x340] sm:$0xff]
        %v363 = vld [vmem:[%s202 + $0x348] sm:$0xff]
        %v364 = vld [vmem:[%s202 + $0x350] sm:$0xff]
        %v365 = vld [vmem:[%s202 + $0x358] sm:$0xff]
        %v366 = vld [vmem:[%s202 + $0x360] sm:$0xff]
        %v367 = vld [vmem:[%s202 + $0x368] sm:$0xff]
        %v368 = vld [vmem:[%s202 + $0x370] sm:$0xff]
        %v369 = vld [vmem:[%s202 + $0x378] sm:$0xff]
        %v370 = vld [vmem:[%s202 + $0x380] sm:$0xff]
        %v371 = vld [vmem:[%s202 + $0x388] sm:$0xff]
        %v372 = vld [vmem:[%s202 + $0x390] sm:$0xff]
        %v373 = vld [vmem:[%s202 + $0x398] sm:$0xff]
        %v374 = vld [vmem:[%s202 + $0x3a0] sm:$0xff]
        %v375 = vld [vmem:[%s202 + $0x3a8] sm:$0xff]
        %v376 = vld [vmem:[%s202 + $0x3b0] sm:$0xff]
        %v377 = vld [vmem:[%s202 + $0x3b8] sm:$0xff]
        %v378 = vld [vmem:[%s202 + $0x3c0] sm:$0xff]
        %v379 = vld [vmem:[%s202 + $0x3c8] sm:$0xff]
        %v380 = vld [vmem:[%s202 + $0x3d0] sm:$0xff]
        %v381 = vld [vmem:[%s202 + $0x3d8] sm:$0xff]
        %v382 = vld [vmem:[%s202 + $0x3e0] sm:$0xff]
        %v383 = vld [vmem:[%s202 + $0x3e8] sm:$0xff]
        %v384 = vld [vmem:[%s202 + $0x3f0] sm:$0xff]
        %v385 = vld [vmem:[%s202 + $0x3f8] sm:$0xff]
        %v386 = vld [vmem:[%s202 + $0x400] sm:$0xff]
        %v387 = vld [vmem:[%s202 + $0x408] sm:$0xff]
        %v388 = vld [vmem:[%s202 + $0x410] sm:$0xff]
        %v389 = vld [vmem:[%s202 + $0x418] sm:$0xff]
        %v390 = vld [vmem:[%s202 + $0x420] sm:$0xff]
        %v391 = vld [vmem:[%s202 + $0x428] sm:$0xff]
        %v392 = vld [vmem:[%s202 + $0x430] sm:$0xff]
        %v393 = vld [vmem:[%s202 + $0x438] sm:$0xff]
        %v394 = vld [vmem:[%s202 + $0x440] sm:$0xff]
        %v395 = vld [vmem:[%s202 + $0x448] sm:$0xff]
        %v396 = vld [vmem:[%s202 + $0x450] sm:$0xff]
        %v397 = vld [vmem:[%s202 + $0x458] sm:$0xff]
        %v398 = vld [vmem:[%s202 + $0x460] sm:$0xff]
        %v399 = vld [vmem:[%s202 + $0x468] sm:$0xff]
        %v400 = vld [vmem:[%s202 + $0x470] sm:$0xff]
        %v401 = vld [vmem:[%s202 + $0x478] sm:$0xff]
        %v402 = vld [vmem:[%s202 + $0x480] sm:$0xff]
        %v403 = vld [vmem:[%s202 + $0x488] sm:$0xff]
        %v404 = vld [vmem:[%s202 + $0x490] sm:$0xff]
        %v405 = vld [vmem:[%s202 + $0x498] sm:$0xff]
        %v406 = vld [vmem:[%s202 + $0x4a0] sm:$0xff]
        %v407 = vld [vmem:[%s202 + $0x4a8] sm:$0xff]
        %v408 = vld [vmem:[%s202 + $0x4b0] sm:$0xff]
        %v409 = vld [vmem:[%s202 + $0x4b8] sm:$0xff]
        %v410 = vld [vmem:[%s202 + $0x4c0] sm:$0xff]
        %v411 = vld [vmem:[%s202 + $0x4c8] sm:$0xff]
        %v412 = vld [vmem:[%s202 + $0x4d0] sm:$0xff]
        %v413 = vld [vmem:[%s202 + $0x4d8] sm:$0xff]
        %v414 = vld [vmem:[%s202 + $0x4e0] sm:$0xff]
        %v415 = vld [vmem:[%s202 + $0x4e8] sm:$0xff]
        %v416 = vld [vmem:[%s202 + $0x4f0] sm:$0xff]
        %v417 = vld [vmem:[%s202 + $0x4f8] sm:$0xff]
        %v418 = vld [vmem:[%s202 + $0x500] sm:$0xff]
        %v419 = vld [vmem:[%s202 + $0x508] sm:$0xff]
        %v420 = vld [vmem:[%s202 + $0x510] sm:$0xff]
        %v421 = vld [vmem:[%s202 + $0x518] sm:$0xff]
        %v422 = vld [vmem:[%s202 + $0x520] sm:$0xff]
        %v423 = vld [vmem:[%s202 + $0x528] sm:$0xff]
        %v424 = vld [vmem:[%s202 + $0x530] sm:$0xff]
        %v425 = vld [vmem:[%s202 + $0x538] sm:$0xff]
        %v426 = vld [vmem:[%s202 + $0x540] sm:$0xff]
        %v427 = vld [vmem:[%s202 + $0x548] sm:$0xff]
        %v428 = vld [vmem:[%s202 + $0x550] sm:$0xff]
        %v429 = vld [vmem:[%s202 + $0x558] sm:$0xff]
        %v430 = vld [vmem:[%s202 + $0x560] sm:$0xff]
        %v431 = vld [vmem:[%s202 + $0x568] sm:$0xff]
        %v432 = vld [vmem:[%s202 + $0x570] sm:$0xff]
        %v433 = vld [vmem:[%s202 + $0x578] sm:$0xff]
        %v434 = vld [vmem:[%s202 + $0x580] sm:$0xff]
        %v435 = vld [vmem:[%s202 + $0x588] sm:$0xff]
        %v436 = vld [vmem:[%s202 + $0x590] sm:$0xff]
        %v437 = vld [vmem:[%s202 + $0x598] sm:$0xff]
        %v438 = vld [vmem:[%s202 + $0x5a0] sm:$0xff]
        %v439 = vld [vmem:[%s202 + $0x5a8] sm:$0xff]
        %v440 = vld [vmem:[%s202 + $0x5b0] sm:$0xff]
        %v441 = vld [vmem:[%s202 + $0x5b8] sm:$0xff]
        %v442 = vld [vmem:[%s202 + $0x5c0] sm:$0xff]
        %v443 = vld [vmem:[%s202 + $0x5c8] sm:$0xff]
        %v444 = vld [vmem:[%s202 + $0x5d0] sm:$0xff]
        %v445 = vld [vmem:[%s202 + $0x5d8] sm:$0xff]
        %v446 = vld [vmem:[%s202 + $0x5e0] sm:$0xff]
        %v447 = vld [vmem:[%s202 + $0x5e8] sm:$0xff]
        %v448 = vld [vmem:[%s202 + $0x5f0] sm:$0xff]
        %v449 = vld [vmem:[%s202 + $0x5f8] sm:$0xff]
        %v450 = vld [vmem:[%s202 + $0x600] sm:$0xff]
        %v451 = vld [vmem:[%s202 + $0x608] sm:$0xff]
        %v452 = vld [vmem:[%s202 + $0x610] sm:$0xff]
        %v453 = vld [vmem:[%s202 + $0x618] sm:$0xff]
        %v454 = vld [vmem:[%s202 + $0x620] sm:$0xff]
        %v455 = vld [vmem:[%s202 + $0x628] sm:$0xff]
        %v456 = vld [vmem:[%s202 + $0x630] sm:$0xff]
        %v457 = vld [vmem:[%s202 + $0x638] sm:$0xff]
        %v458 = vld [vmem:[%s202 + $0x640] sm:$0xff]
        %v459 = vld [vmem:[%s202 + $0x648] sm:$0xff]
        %v460 = vld [vmem:[%s202 + $0x650] sm:$0xff]
        %v461 = vld [vmem:[%s202 + $0x658] sm:$0xff]
        %v462 = vld [vmem:[%s202 + $0x660] sm:$0xff]
        %v463 = vld [vmem:[%s202 + $0x668] sm:$0xff]
        %v464 = vld [vmem:[%s202 + $0x670] sm:$0xff]
        %v465 = vld [vmem:[%s202 + $0x678] sm:$0xff]
        %v466 = vld [vmem:[%s202 + $0x680] sm:$0xff]
        %v467 = vld [vmem:[%s202 + $0x688] sm:$0xff]
        %v468 = vld [vmem:[%s202 + $0x690] sm:$0xff]
        %v469 = vld [vmem:[%s202 + $0x698] sm:$0xff]
        %v470 = vld [vmem:[%s202 + $0x6a0] sm:$0xff]
        %v471 = vld [vmem:[%s202 + $0x6a8] sm:$0xff]
        %v472 = vld [vmem:[%s202 + $0x6b0] sm:$0xff]
        %v473 = vld [vmem:[%s202 + $0x6b8] sm:$0xff]
        %v474 = vld [vmem:[%s202 + $0x6c0] sm:$0xff]
        %v475 = vld [vmem:[%s202 + $0x6c8] sm:$0xff]
        %v476 = vld [vmem:[%s202 + $0x6d0] sm:$0xff]
        %v477 = vld [vmem:[%s202 + $0x6d8] sm:$0xff]
        %v478 = vld [vmem:[%s202 + $0x6e0] sm:$0xff]
        %v479 = vld [vmem:[%s202 + $0x6e8] sm:$0xff]
        %v480 = vld [vmem:[%s202 + $0x6f0] sm:$0xff]
        %v481 = vld [vmem:[%s202 + $0x6f8] sm:$0xff]
        %v482 = vld [vmem:[%s202 + $0x700] sm:$0xff]
        %v483 = vld [vmem:[%s202 + $0x708] sm:$0xff]
        %v484 = vld [vmem:[%s202 + $0x710] sm:$0xff]
        %v485 = vld [vmem:[%s202 + $0x718] sm:$0xff]
        %v486 = vld [vmem:[%s202 + $0x720] sm:$0xff]
        %v487 = vld [vmem:[%s202 + $0x728] sm:$0xff]
        %v488 = vld [vmem:[%s202 + $0x730] sm:$0xff]
        %v489 = vld [vmem:[%s202 + $0x738] sm:$0xff]
        %v490 = vld [vmem:[%s202 + $0x740] sm:$0xff]
        %v491 = vld [vmem:[%s202 + $0x748] sm:$0xff]
        %v492 = vld [vmem:[%s202 + $0x750] sm:$0xff]
        %v493 = vld [vmem:[%s202 + $0x758] sm:$0xff]
        %v494 = vld [vmem:[%s202 + $0x760] sm:$0xff]
        %v495 = vld [vmem:[%s202 + $0x768] sm:$0xff]
        %v496 = vld [vmem:[%s202 + $0x770] sm:$0xff]
        %v497 = vld [vmem:[%s202 + $0x778] sm:$0xff]
        %v498 = vld [vmem:[%s202 + $0x780] sm:$0xff]
        %v499 = vld [vmem:[%s202 + $0x788] sm:$0xff]
        %v500 = vld [vmem:[%s202 + $0x790] sm:$0xff]
        %v501 = vld [vmem:[%s202 + $0x798] sm:$0xff]
        %v502 = vld [vmem:[%s202 + $0x7a0] sm:$0xff]
        %v503 = vld [vmem:[%s202 + $0x7a8] sm:$0xff]
        %v504 = vld [vmem:[%s202 + $0x7b0] sm:$0xff]
        %v505 = vld [vmem:[%s202 + $0x7b8] sm:$0xff]
        %v506 = vld [vmem:[%s202 + $0x7c0] sm:$0xff]
        %v507 = vld [vmem:[%s202 + $0x7c8] sm:$0xff]
        %v508 = vld [vmem:[%s202 + $0x7d0] sm:$0xff]
        %v509 = vld [vmem:[%s202 + $0x7d8] sm:$0xff]
        %v510 = vld [vmem:[%s202 + $0x7e0] sm:$0xff]
        %v511 = vld [vmem:[%s202 + $0x7e8] sm:$0xff]
        %v512 = vld [vmem:[%s202 + $0x7f0] sm:$0xff]
        %v513 = vld [vmem:[%s202 + $0x7f8] sm:$0xff]
        %v514 = vld [vmem:[%s202 + $0x800] sm:$0xff]
        %v515 = vld [vmem:[%s202 + $0x808] sm:$0xff]
        %v516 = vld [vmem:[%s202 + $0x810] sm:$0xff]
        %v517 = vld [vmem:[%s202 + $0x818] sm:$0xff]
        %v518 = vld [vmem:[%s202 + $0x820] sm:$0xff]
        %v519 = vld [vmem:[%s202 + $0x828] sm:$0xff]
        %v520 = vld [vmem:[%s202 + $0x830] sm:$0xff]
        %v521 = vld [vmem:[%s202 + $0x838] sm:$0xff]
        %v522 = vld [vmem:[%s202 + $0x840] sm:$0xff]
        %v523 = vld [vmem:[%s202 + $0x848] sm:$0xff]
        %v524 = vld [vmem:[%s202 + $0x850] sm:$0xff]
        %v525 = vld [vmem:[%s202 + $0x858] sm:$0xff]
        %v526 = vld [vmem:[%s202 + $0x860] sm:$0xff]
        %v527 = vld [vmem:[%s202 + $0x868] sm:$0xff]
        %v528 = vld [vmem:[%s202 + $0x870] sm:$0xff]
        %v529 = vld [vmem:[%s202 + $0x878] sm:$0xff]
        %v530 = vld [vmem:[%s202 + $0x880] sm:$0xff]
        %v531 = vld [vmem:[%s202 + $0x888] sm:$0xff]
        %v532 = vld [vmem:[%s202 + $0x890] sm:$0xff]
        %v533 = vld [vmem:[%s202 + $0x898] sm:$0xff]
        %v534 = vld [vmem:[%s202 + $0x8a0] sm:$0xff]
        %v535 = vld [vmem:[%s202 + $0x8a8] sm:$0xff]
        %v536 = vld [vmem:[%s202 + $0x8b0] sm:$0xff]
        %v537 = vld [vmem:[%s202 + $0x8b8] sm:$0xff]
        %v538 = vld [vmem:[%s202 + $0x8c0] sm:$0xff]
        %v539 = vld [vmem:[%s202 + $0x8c8] sm:$0xff]
        %v540 = vld [vmem:[%s202 + $0x8d0] sm:$0xff]
        %v541 = vld [vmem:[%s202 + $0x8d8] sm:$0xff]
        %v542 = vld [vmem:[%s202 + $0x8e0] sm:$0xff]
        %v543 = vld [vmem:[%s202 + $0x8e8] sm:$0xff]
        %v544 = vld [vmem:[%s202 + $0x8f0] sm:$0xff]
        %v545 = vld [vmem:[%s202 + $0x8f8] sm:$0xff]
        %v546 = vld [vmem:[%s202 + $0x900] sm:$0xff]
        %v547 = vld [vmem:[%s202 + $0x908] sm:$0xff]
        %v548 = vld [vmem:[%s202 + $0x910] sm:$0xff]
        %v549 = vld [vmem:[%s202 + $0x918] sm:$0xff]
        %v550 = vld [vmem:[%s202 + $0x920] sm:$0xff]
        %v551 = vld [vmem:[%s202 + $0x928] sm:$0xff]
        %v552 = vld [vmem:[%s202 + $0x930] sm:$0xff]
        %v553 = vld [vmem:[%s202 + $0x938] sm:$0xff]
        %v554 = vld [vmem:[%s202 + $0x940] sm:$0xff]
        %v555 = vld [vmem:[%s202 + $0x948] sm:$0xff]
        %v556 = vld [vmem:[%s202 + $0x950] sm:$0xff]
        %v557 = vld [vmem:[%s202 + $0x958] sm:$0xff]
        %v558 = vld [vmem:[%s202 + $0x960] sm:$0xff]
        %v559 = vld [vmem:[%s202 + $0x968] sm:$0xff]
        %v560 = vld [vmem:[%s202 + $0x970] sm:$0xff]
        %v561 = vld [vmem:[%s202 + $0x978] sm:$0xff]
        %v562 = vld [vmem:[%s202 + $0x980] sm:$0xff]
        %v563 = vld [vmem:[%s202 + $0x988] sm:$0xff]
        %v564 = vld [vmem:[%s202 + $0x990] sm:$0xff]
        %v565 = vld [vmem:[%s202 + $0x998] sm:$0xff]
        %v566 = vld [vmem:[%s202 + $0x9a0] sm:$0xff]
        %v567 = vld [vmem:[%s202 + $0x9a8] sm:$0xff]
        %v568 = vld [vmem:[%s202 + $0x9b0] sm:$0xff]
        %v569 = vld [vmem:[%s202 + $0x9b8] sm:$0xff]
        %v570 = vld [vmem:[%s202 + $0x9c0] sm:$0xff]
        %v571 = vld [vmem:[%s202 + $0x9c8] sm:$0xff]
        %v572 = vld [vmem:[%s202 + $0x9d0] sm:$0xff]
        %v573 = vld [vmem:[%s202 + $0x9d8] sm:$0xff]
        %v574 = vld [vmem:[%s202 + $0x9e0] sm:$0xff]
        %v575 = vld [vmem:[%s202 + $0x9e8] sm:$0xff]
        %v576 = vld [vmem:[%s202 + $0x9f0] sm:$0xff]
        %v577 = vld [vmem:[%s202 + $0x9f8] sm:$0xff]
        %v578 = vld [vmem:[%s202 + $0xa00] sm:$0xff]
        %v579 = vld [vmem:[%s202 + $0xa08] sm:$0xff]
        %v580 = vld [vmem:[%s202 + $0xa10] sm:$0xff]
        %v581 = vld [vmem:[%s202 + $0xa18] sm:$0xff]
        %v582 = vld [vmem:[%s202 + $0xa20] sm:$0xff]
        %v583 = vld [vmem:[%s202 + $0xa28] sm:$0xff]
        %v584 = vld [vmem:[%s202 + $0xa30] sm:$0xff]
        %v585 = vld [vmem:[%s202 + $0xa38] sm:$0xff]
        %v586 = vld [vmem:[%s202 + $0xa40] sm:$0xff]
        %v587 = vld [vmem:[%s202 + $0xa48] sm:$0xff]
        %v588 = vld [vmem:[%s202 + $0xa50] sm:$0xff]
        %v589 = vld [vmem:[%s202 + $0xa58] sm:$0xff]
        %v590 = vld [vmem:[%s202 + $0xa60] sm:$0xff]
        %v591 = vld [vmem:[%s202 + $0xa68] sm:$0xff]
        %v592 = vld [vmem:[%s202 + $0xa70] sm:$0xff]
        %v593 = vld [vmem:[%s202 + $0xa78] sm:$0xff]
        %v594 = vld [vmem:[%s202 + $0xa80] sm:$0xff]
        %v595 = vld [vmem:[%s202 + $0xa88] sm:$0xff]
        %v596 = vld [vmem:[%s202 + $0xa90] sm:$0xff]
        %v597 = vld [vmem:[%s202 + $0xa98] sm:$0xff]
        %v598 = vld [vmem:[%s202 + $0xaa0] sm:$0xff]
        %v599 = vld [vmem:[%s202 + $0xaa8] sm:$0xff]
        %v600 = vld [vmem:[%s202 + $0xab0] sm:$0xff]
        %v601 = vld [vmem:[%s202 + $0xab8] sm:$0xff]
        %v602 = vld [vmem:[%s202 + $0xac0] sm:$0xff]
        %v603 = vld [vmem:[%s202 + $0xac8] sm:$0xff]
        %v604 = vld [vmem:[%s202 + $0xad0] sm:$0xff]
        %v605 = vld [vmem:[%s202 + $0xad8] sm:$0xff]
        %v606 = vld [vmem:[%s202 + $0xae0] sm:$0xff]
        %v607 = vld [vmem:[%s202 + $0xae8] sm:$0xff]
        %v608 = vld [vmem:[%s202 + $0xaf0] sm:$0xff]
        %v609 = vld [vmem:[%s202 + $0xaf8] sm:$0xff]
        %v610 = vld [vmem:[%s202 + $0xb00] sm:$0xff]
        %v611 = vld [vmem:[%s202 + $0xb08] sm:$0xff]
        %v612 = vld [vmem:[%s202 + $0xb10] sm:$0xff]
        %v613 = vld [vmem:[%s202 + $0xb18] sm:$0xff]
        %v614 = vld [vmem:[%s202 + $0xb20] sm:$0xff]
        %v615 = vld [vmem:[%s202 + $0xb28] sm:$0xff]
        %v616 = vld [vmem:[%s202 + $0xb30] sm:$0xff]
        %v617 = vld [vmem:[%s202 + $0xb38] sm:$0xff]
        %v618 = vld [vmem:[%s202 + $0xb40] sm:$0xff]
        %v619 = vld [vmem:[%s202 + $0xb48] sm:$0xff]
        %v620 = vld [vmem:[%s202 + $0xb50] sm:$0xff]
        %v621 = vld [vmem:[%s202 + $0xb58] sm:$0xff]
        %v622 = vld [vmem:[%s202 + $0xb60] sm:$0xff]
        %v623 = vld [vmem:[%s202 + $0xb68] sm:$0xff]
        %v624 = vld [vmem:[%s202 + $0xb70] sm:$0xff]
        %v625 = vld [vmem:[%s202 + $0xb78] sm:$0xff]
        %v626 = vld [vmem:[%s202 + $0xb80] sm:$0xff]
        %v627 = vld [vmem:[%s202 + $0xb88] sm:$0xff]
        %v628 = vld [vmem:[%s202 + $0xb90] sm:$0xff]
        %v629 = vld [vmem:[%s202 + $0xb98] sm:$0xff]
        %v630 = vld [vmem:[%s202 + $0xba0] sm:$0xff]
        %v631 = vld [vmem:[%s202 + $0xba8] sm:$0xff]
        %v632 = vld [vmem:[%s202 + $0xbb0] sm:$0xff]
        %v633 = vld [vmem:[%s202 + $0xbb8] sm:$0xff]
        %v634 = vld [vmem:[%s202 + $0xbc0] sm:$0xff]
        %v635 = vld [vmem:[%s202 + $0xbc8] sm:$0xff]
        %v636 = vld [vmem:[%s202 + $0xbd0] sm:$0xff]
        %v637 = vld [vmem:[%s202 + $0xbd8] sm:$0xff]
        %v638 = vld [vmem:[%s202 + $0xbe0] sm:$0xff]
        %v639 = vld [vmem:[%s202 + $0xbe8] sm:$0xff]
        %v640 = vld [vmem:[%s202 + $0xbf0] sm:$0xff]
        %v641 = vld [vmem:[%s202 + $0xbf8] sm:$0xff]
        %v642 = vld [vmem:[%s202 + $0xc00] sm:$0xff]
        %v643 = vld [vmem:[%s202 + $0xc08] sm:$0xff]
        %v644 = vld [vmem:[%s202 + $0xc10] sm:$0xff]
        %v645 = vld [vmem:[%s202 + $0xc18] sm:$0xff]
        %v646 = vld [vmem:[%s202 + $0xc20] sm:$0xff]
        %v647 = vld [vmem:[%s202 + $0xc28] sm:$0xff]
        %v648 = vld [vmem:[%s202 + $0xc30] sm:$0xff]
        %v649 = vld [vmem:[%s202 + $0xc38] sm:$0xff]
        %v650 = vld [vmem:[%s202 + $0xc40] sm:$0xff]
        %v651 = vld [vmem:[%s202 + $0xc48] sm:$0xff]
        %v652 = vld [vmem:[%s202 + $0xc50] sm:$0xff]
        %v653 = vld [vmem:[%s202 + $0xc58] sm:$0xff]
        %v654 = vld [vmem:[%s202 + $0xc60] sm:$0xff]
        %v655 = vld [vmem:[%s202 + $0xc68] sm:$0xff]
        %v656 = vld [vmem:[%s202 + $0xc70] sm:$0xff]
        %v657 = vld [vmem:[%s202 + $0xc78] sm:$0xff]
        %v658 = vld [vmem:[%s202 + $0xc80] sm:$0xff]
        %v659 = vld [vmem:[%s202 + $0xc88] sm:$0xff]
        %v660 = vld [vmem:[%s202 + $0xc90] sm:$0xff]
        %v661 = vld [vmem:[%s202 + $0xc98] sm:$0xff]
        %v662 = vld [vmem:[%s202 + $0xca0] sm:$0xff]
        %v663 = vld [vmem:[%s202 + $0xca8] sm:$0xff]
        %v664 = vld [vmem:[%s202 + $0xcb0] sm:$0xff]
        %v665 = vld [vmem:[%s202 + $0xcb8] sm:$0xff]
        %v666 = vld [vmem:[%s202 + $0xcc0] sm:$0xff]
        %v667 = vld [vmem:[%s202 + $0xcc8] sm:$0xff]
        %v668 = vld [vmem:[%s202 + $0xcd0] sm:$0xff]
        %v669 = vld [vmem:[%s202 + $0xcd8] sm:$0xff]
        %v670 = vld [vmem:[%s202 + $0xce0] sm:$0xff]
        %v671 = vld [vmem:[%s202 + $0xce8] sm:$0xff]
        %v672 = vld [vmem:[%s202 + $0xcf0] sm:$0xff]
        %v673 = vld [vmem:[%s202 + $0xcf8] sm:$0xff]
        %v674 = vld [vmem:[%s202 + $0xd00] sm:$0xff]
        %v675 = vld [vmem:[%s202 + $0xd08] sm:$0xff]
        %v676 = vld [vmem:[%s202 + $0xd10] sm:$0xff]
        %v677 = vld [vmem:[%s202 + $0xd18] sm:$0xff]
        %v678 = vld [vmem:[%s202 + $0xd20] sm:$0xff]
        %v679 = vld [vmem:[%s202 + $0xd28] sm:$0xff]
        %v680 = vld [vmem:[%s202 + $0xd30] sm:$0xff]
        %v681 = vld [vmem:[%s202 + $0xd38] sm:$0xff]
        %v682 = vld [vmem:[%s202 + $0xd40] sm:$0xff]
        %v683 = vld [vmem:[%s202 + $0xd48] sm:$0xff]
        %v684 = vld [vmem:[%s202 + $0xd50] sm:$0xff]
        %v685 = vld [vmem:[%s202 + $0xd58] sm:$0xff]
        %v686 = vld [vmem:[%s202 + $0xd60] sm:$0xff]
        %v687 = vld [vmem:[%s202 + $0xd68] sm:$0xff]
        %v688 = vld [vmem:[%s202 + $0xd70] sm:$0xff]
        %v689 = vld [vmem:[%s202 + $0xd78] sm:$0xff]
        %v690 = vld [vmem:[%s202 + $0xd80] sm:$0xff]
        %v691 = vld [vmem:[%s202 + $0xd88] sm:$0xff]
        %v692 = vld [vmem:[%s202 + $0xd90] sm:$0xff]
        %v693 = vld [vmem:[%s202 + $0xd98] sm:$0xff]
        %v694 = vld [vmem:[%s202 + $0xda0] sm:$0xff]
        %v695 = vld [vmem:[%s202 + $0xda8] sm:$0xff]
        %v696 = vld [vmem:[%s202 + $0xdb0] sm:$0xff]
        %v697 = vld [vmem:[%s202 + $0xdb8] sm:$0xff]
        %v698 = vld [vmem:[%s202 + $0xdc0] sm:$0xff]
        %v699 = vld [vmem:[%s202 + $0xdc8] sm:$0xff]
        %v700 = vld [vmem:[%s202 + $0xdd0] sm:$0xff]
        %v701 = vld [vmem:[%s202 + $0xdd8] sm:$0xff]
        %v702 = vld [vmem:[%s202 + $0xde0] sm:$0xff]
        %v703 = vld [vmem:[%s202 + $0xde8] sm:$0xff]
        %v704 = vld [vmem:[%s202 + $0xdf0] sm:$0xff]
        %v705 = vld [vmem:[%s202 + $0xdf8] sm:$0xff]
        %v706 = vld [vmem:[%s202 + $0xe00] sm:$0xff]
        %v707 = vld [vmem:[%s202 + $0xe08] sm:$0xff]
        %v708 = vld [vmem:[%s202 + $0xe10] sm:$0xff]
        %v709 = vld [vmem:[%s202 + $0xe18] sm:$0xff]
        %v710 = vld [vmem:[%s202 + $0xe20] sm:$0xff]
        %v711 = vld [vmem:[%s202 + $0xe28] sm:$0xff]
        %v712 = vld [vmem:[%s202 + $0xe30] sm:$0xff]
        %v713 = vld [vmem:[%s202 + $0xe38] sm:$0xff]
        %v714 = vld [vmem:[%s202 + $0xe40] sm:$0xff]
        %v715 = vld [vmem:[%s202 + $0xe48] sm:$0xff]
        %v716 = vld [vmem:[%s202 + $0xe50] sm:$0xff]
        %v717 = vld [vmem:[%s202 + $0xe58] sm:$0xff]
        %v718 = vld [vmem:[%s202 + $0xe60] sm:$0xff]
        %v719 = vld [vmem:[%s202 + $0xe68] sm:$0xff]
        %v720 = vld [vmem:[%s202 + $0xe70] sm:$0xff]
        %v721 = vld [vmem:[%s202 + $0xe78] sm:$0xff]
        %v722 = vld [vmem:[%s202 + $0xe80] sm:$0xff]
        %v723 = vld [vmem:[%s202 + $0xe88] sm:$0xff]
        %v724 = vld [vmem:[%s202 + $0xe90] sm:$0xff]
        %v725 = vld [vmem:[%s202 + $0xe98] sm:$0xff]
        %v726 = vld [vmem:[%s202 + $0xea0] sm:$0xff]
        %v727 = vld [vmem:[%s202 + $0xea8] sm:$0xff]
        %v728 = vld [vmem:[%s202 + $0xeb0] sm:$0xff]
        %v729 = vld [vmem:[%s202 + $0xeb8] sm:$0xff]
        %v730 = vld [vmem:[%s202 + $0xec0] sm:$0xff]
        %v731 = vld [vmem:[%s202 + $0xec8] sm:$0xff]
        %v732 = vld [vmem:[%s202 + $0xed0] sm:$0xff]
        %v733 = vld [vmem:[%s202 + $0xed8] sm:$0xff]
        %v734 = vld [vmem:[%s202 + $0xee0] sm:$0xff]
        %v735 = vld [vmem:[%s202 + $0xee8] sm:$0xff]
        %v736 = vld [vmem:[%s202 + $0xef0] sm:$0xff]
        %v737 = vld [vmem:[%s202 + $0xef8] sm:$0xff]
        %v738 = vld [vmem:[%s202 + $0xf00] sm:$0xff]
        %v739 = vld [vmem:[%s202 + $0xf08] sm:$0xff]
        %v740 = vld [vmem:[%s202 + $0xf10] sm:$0xff]
        %v741 = vld [vmem:[%s202 + $0xf18] sm:$0xff]
        %v742 = vld [vmem:[%s202 + $0xf20] sm:$0xff]
        %v743 = vld [vmem:[%s202 + $0xf28] sm:$0xff]
        %v744 = vld [vmem:[%s202 + $0xf30] sm:$0xff]
        %v745 = vld [vmem:[%s202 + $0xf38] sm:$0xff]
        %v746 = vld [vmem:[%s202 + $0xf40] sm:$0xff]
        %v747 = vld [vmem:[%s202 + $0xf48] sm:$0xff]
        %v748 = vld [vmem:[%s202 + $0xf50] sm:$0xff]
        %v749 = vld [vmem:[%s202 + $0xf58] sm:$0xff]
        %v750 = vld [vmem:[%s202 + $0xf60] sm:$0xff]
        %v751 = vld [vmem:[%s202 + $0xf68] sm:$0xff]
        %v752 = vld [vmem:[%s202 + $0xf70] sm:$0xff]
        %v753 = vld [vmem:[%s202 + $0xf78] sm:$0xff]
        %v754 = vld [vmem:[%s202 + $0xf80] sm:$0xff]
        %v755 = vld [vmem:[%s202 + $0xf88] sm:$0xff]
        %v756 = vld [vmem:[%s202 + $0xf90] sm:$0xff]
        %v757 = vld [vmem:[%s202 + $0xf98] sm:$0xff]
        %v758 = vld [vmem:[%s202 + $0xfa0] sm:$0xff]
        %v759 = vld [vmem:[%s202 + $0xfa8] sm:$0xff]
        %v760 = vld [vmem:[%s202 + $0xfb0] sm:$0xff]
        %v761 = vld [vmem:[%s202 + $0xfb8] sm:$0xff]
        %v762 = vld [vmem:[%s202 + $0xfc0] sm:$0xff]
        %v763 = vld [vmem:[%s202 + $0xfc8] sm:$0xff]
        %v764 = vld [vmem:[%s202 + $0xfd0] sm:$0xff]
        %v765 = vld [vmem:[%s202 + $0xfd8] sm:$0xff]
        %v766 = vld [vmem:[%s202 + $0xfe0] sm:$0xff]
        %v767 = vld [vmem:[%s202 + $0xfe8] sm:$0xff]
        %v768 = vld [vmem:[%s202 + $0xff0] sm:$0xff]
        %v769 = vld [vmem:[%s202 + $0xff8] sm:$0xff]
        %v770 = vld [vmem:[%s211] sm:$0xf]
        %v772 = vlaneseq
        %v773 = vshrl.u32 %v772, 7
        %v774 = vsub.s32 0, %v773
        %v775 = vrot.slane %v770, %v774
        %v776 = vlaneseq
        %v777 = vshrl.u32 %v776, 7
        %v778 = vsub.s32 1, %v777
        %v779 = vrot.slane %v770, %v778
        %v780 = vlaneseq
        %v781 = vshrl.u32 %v780, 7
        %v782 = vsub.s32 2, %v781
        %v783 = vrot.slane %v770, %v782
        %v784 = vlaneseq
        %v785 = vshrl.u32 %v784, 7
        %v786 = vsub.s32 3, %v785
        %v787 = vrot.slane %v770, %v786
        %792 = vmatprep.subr.mxu0 %v319
        %793 = vmatpush1.msra.mxu0 %v318
        %794 = vmatprep.subr.mxu0 %v315
        %795 = vmatpush1.msra.mxu0 %v314
        %796 = vmatprep.subr.mxu0 %v311
        %797 = vmatpush1.msra.mxu0 %v310
        %798 = vmatprep.subr.mxu0 %v307
        %799 = vmatpush1.msra.mxu0 %v306
        %800 = vmatprep.subr.mxu0 %v303
        %801 = vmatpush1.msra.mxu0 %v302
        %802 = vmatprep.subr.mxu0 %v299
        %803 = vmatpush1.msra.mxu0 %v298
        %804 = vmatprep.subr.mxu0 %v295
        %805 = vmatpush1.msra.mxu0 %v294
        %806 = vmatprep.subr.mxu0 %v291
        %807 = vmatpush1.msra.mxu0 %v290
        %808 = vmatprep.subr.mxu0 %v287
        %809 = vmatpush1.msra.mxu0 %v286
        %810 = vmatprep.subr.mxu0 %v283
        %811 = vmatpush1.msra.mxu0 %v282
        %812 = vmatprep.subr.mxu0 %v279
        %813 = vmatpush1.msra.mxu0 %v278
        %814 = vmatprep.subr.mxu0 %v275
        %815 = vmatpush1.msra.mxu0 %v274
        %816 = vmatprep.subr.mxu0 %v271
        %817 = vmatpush1.msra.mxu0 %v270
        %818 = vmatprep.subr.mxu0 %v267
        %819 = vmatpush1.msra.mxu0 %v266
        %820 = vmatprep.subr.mxu0 %v263
        %821 = vmatpush1.msra.mxu0 %v262
        %822 = vmatprep.subr.mxu0 %v259
        %823 = vmatpush1.msra.mxu0 %v258
        %824 = vmatprep.subr.mxu0 %v383
        %825 = vmatpush2.msra.mxu0 %v382
        %826 = vmatprep.subr.mxu0 %v379
        %827 = vmatpush2.msra.mxu0 %v378
        %828 = vmatprep.subr.mxu0 %v375
        %829 = vmatpush2.msra.mxu0 %v374
        %830 = vmatprep.subr.mxu0 %v371
        %831 = vmatpush2.msra.mxu0 %v370
        %832 = vmatprep.subr.mxu0 %v367
        %833 = vmatpush2.msra.mxu0 %v366
        %834 = vmatprep.subr.mxu0 %v363
        %835 = vmatpush2.msra.mxu0 %v362
        %836 = vmatprep.subr.mxu0 %v359
        %837 = vmatpush2.msra.mxu0 %v358
        %838 = vmatprep.subr.mxu0 %v355
        %839 = vmatpush2.msra.mxu0 %v354
        %840 = vmatprep.subr.mxu0 %v351
        %841 = vmatpush2.msra.mxu0 %v350
        %842 = vmatprep.subr.mxu0 %v347
        %843 = vmatpush2.msra.mxu0 %v346
        %844 = vmatprep.subr.mxu0 %v343
        %845 = vmatpush2.msra.mxu0 %v342
        %846 = vmatprep.subr.mxu0 %v339
        %847 = vmatpush2.msra.mxu0 %v338
        %848 = vmatprep.subr.mxu0 %v335
        %849 = vmatpush2.msra.mxu0 %v334
        %850 = vmatprep.subr.mxu0 %v331
        %851 = vmatpush2.msra.mxu0 %v330
        %852 = vmatprep.subr.mxu0 %v327
        %853 = vmatpush2.msra.mxu0 %v326
        %854 = vmatprep.subr.mxu0 %v323
        %855 = vmatpush2.msra.mxu0 %v322
        %856 = vmatprep.mubr.f32.mxu0 %v243
        %857 = vmatmul.mubr.f32.gmra.mxu0 %v242
        %v858 = vpop.f32.mrf.mxu0
        %v859 = vadd.f32 %v775, %v858
        %v860 = vpop.f32.mrf.mxu0
        %v861 = vadd.f32 %v779, %v860
        %862 = vmatprep.mubr.f32.mxu0 %v251
        %863 = vmatmul.mubr.f32.gmra.mxu0 %v250
        %v864 = vpop.f32.mrf.mxu0
        %v865 = vadd.f32 %v775, %v864
        %v866 = vpop.f32.mrf.mxu0
        %v867 = vadd.f32 %v779, %v866
        %868 = vdwg.mxu0
        %869 = vmatprep.subr.mxu0 %v447
        %870 = vmatpush1.msra.mxu0 %v446
        %871 = vmatprep.subr.mxu0 %v443
        %872 = vmatpush1.msra.mxu0 %v442
        %873 = vmatprep.subr.mxu0 %v439
        %874 = vmatpush1.msra.mxu0 %v438
        %875 = vmatprep.subr.mxu0 %v435
        %876 = vmatpush1.msra.mxu0 %v434
        %877 = vmatprep.subr.mxu0 %v431
        %878 = vmatpush1.msra.mxu0 %v430
        %879 = vmatprep.subr.mxu0 %v427
        %880 = vmatpush1.msra.mxu0 %v426
        %881 = vmatprep.subr.mxu0 %v423
        %882 = vmatpush1.msra.mxu0 %v422
        %883 = vmatprep.subr.mxu0 %v419
        %884 = vmatpush1.msra.mxu0 %v418
        %885 = vmatprep.subr.mxu0 %v415
        %886 = vmatpush1.msra.mxu0 %v414
        %887 = vmatprep.subr.mxu0 %v411
        %888 = vmatpush1.msra.mxu0 %v410
        %889 = vmatprep.subr.mxu0 %v407
        %890 = vmatpush1.msra.mxu0 %v406
        %891 = vmatprep.subr.mxu0 %v403
        %892 = vmatpush1.msra.mxu0 %v402
        %893 = vmatprep.subr.mxu0 %v399
        %894 = vmatpush1.msra.mxu0 %v398
        %895 = vmatprep.subr.mxu0 %v395
        %896 = vmatpush1.msra.mxu0 %v394
        %897 = vmatprep.subr.mxu0 %v391
        %898 = vmatpush1.msra.mxu0 %v390
        %899 = vmatprep.subr.mxu0 %v387
        %900 = vmatpush1.msra.mxu0 %v386
        %901 = vmatprep.subr.mxu0 %v511
        %902 = vmatpush2.msra.mxu0 %v510
        %903 = vmatprep.subr.mxu0 %v507
        %904 = vmatpush2.msra.mxu0 %v506
        %905 = vmatprep.subr.mxu0 %v503
        %906 = vmatpush2.msra.mxu0 %v502
        %907 = vmatprep.subr.mxu0 %v499
        %908 = vmatpush2.msra.mxu0 %v498
        %909 = vmatprep.subr.mxu0 %v495
        %910 = vmatpush2.msra.mxu0 %v494
        %911 = vmatprep.subr.mxu0 %v491
        %912 = vmatpush2.msra.mxu0 %v490
        %913 = vmatprep.subr.mxu0 %v487
        %914 = vmatpush2.msra.mxu0 %v486
        %915 = vmatprep.subr.mxu0 %v483
        %916 = vmatpush2.msra.mxu0 %v482
        %917 = vmatprep.subr.mxu0 %v479
        %918 = vmatpush2.msra.mxu0 %v478
        %919 = vmatprep.subr.mxu0 %v475
        %920 = vmatpush2.msra.mxu0 %v474
        %921 = vmatprep.subr.mxu0 %v471
        %922 = vmatpush2.msra.mxu0 %v470
        %923 = vmatprep.subr.mxu0 %v467
        %924 = vmatpush2.msra.mxu0 %v466
        %925 = vmatprep.subr.mxu0 %v463
        %926 = vmatpush2.msra.mxu0 %v462
        %927 = vmatprep.subr.mxu0 %v459
        %928 = vmatpush2.msra.mxu0 %v458
        %929 = vmatprep.subr.mxu0 %v455
        %930 = vmatpush2.msra.mxu0 %v454
        %931 = vmatprep.subr.mxu0 %v451
        %932 = vmatpush2.msra.mxu0 %v450
        %933 = vmatprep.mubr.f32.mxu0 %v245
        %934 = vmatmul.mubr.f32.gmra.mxu0 %v244
        %v935 = vpop.f32.mrf.mxu0
        %v936 = vadd.f32 %v859, %v935
        %v937 = vpop.f32.mrf.mxu0
        %v938 = vadd.f32 %v861, %v937
        %939 = vmatprep.mubr.f32.mxu0 %v253
        %940 = vmatmul.mubr.f32.gmra.mxu0 %v252
        %v941 = vpop.f32.mrf.mxu0
        %v942 = vadd.f32 %v865, %v941
        %v943 = vpop.f32.mrf.mxu0
        %v944 = vadd.f32 %v867, %v943
        %945 = vdwg.mxu0
        %946 = vmatprep.subr.mxu0 %v575
        %947 = vmatpush1.msra.mxu0 %v574
        %948 = vmatprep.subr.mxu0 %v571
        %949 = vmatpush1.msra.mxu0 %v570
        %950 = vmatprep.subr.mxu0 %v567
        %951 = vmatpush1.msra.mxu0 %v566
        %952 = vmatprep.subr.mxu0 %v563
        %953 = vmatpush1.msra.mxu0 %v562
        %954 = vmatprep.subr.mxu0 %v559
        %955 = vmatpush1.msra.mxu0 %v558
        %956 = vmatprep.subr.mxu0 %v555
        %957 = vmatpush1.msra.mxu0 %v554
        %958 = vmatprep.subr.mxu0 %v551
        %959 = vmatpush1.msra.mxu0 %v550
        %960 = vmatprep.subr.mxu0 %v547
        %961 = vmatpush1.msra.mxu0 %v546
        %962 = vmatprep.subr.mxu0 %v543
        %963 = vmatpush1.msra.mxu0 %v542
        %964 = vmatprep.subr.mxu0 %v539
        %965 = vmatpush1.msra.mxu0 %v538
        %966 = vmatprep.subr.mxu0 %v535
        %967 = vmatpush1.msra.mxu0 %v534
        %968 = vmatprep.subr.mxu0 %v531
        %969 = vmatpush1.msra.mxu0 %v530
        %970 = vmatprep.subr.mxu0 %v527
        %971 = vmatpush1.msra.mxu0 %v526
        %972 = vmatprep.subr.mxu0 %v523
        %973 = vmatpush1.msra.mxu0 %v522
        %974 = vmatprep.subr.mxu0 %v519
        %975 = vmatpush1.msra.mxu0 %v518
        %976 = vmatprep.subr.mxu0 %v515
        %977 = vmatpush1.msra.mxu0 %v514
        %978 = vmatprep.subr.mxu0 %v639
        %979 = vmatpush2.msra.mxu0 %v638
        %980 = vmatprep.subr.mxu0 %v635
        %981 = vmatpush2.msra.mxu0 %v634
        %982 = vmatprep.subr.mxu0 %v631
        %983 = vmatpush2.msra.mxu0 %v630
        %984 = vmatprep.subr.mxu0 %v627
        %985 = vmatpush2.msra.mxu0 %v626
        %986 = vmatprep.subr.mxu0 %v623
        %987 = vmatpush2.msra.mxu0 %v622
        %988 = vmatprep.subr.mxu0 %v619
        %989 = vmatpush2.msra.mxu0 %v618
        %990 = vmatprep.subr.mxu0 %v615
        %991 = vmatpush2.msra.mxu0 %v614
        %992 = vmatprep.subr.mxu0 %v611
        %993 = vmatpush2.msra.mxu0 %v610
        %994 = vmatprep.subr.mxu0 %v607
        %995 = vmatpush2.msra.mxu0 %v606
        %996 = vmatprep.subr.mxu0 %v603
        %997 = vmatpush2.msra.mxu0 %v602
        %998 = vmatprep.subr.mxu0 %v599
        %999 = vmatpush2.msra.mxu0 %v598
        %1000 = vmatprep.subr.mxu0 %v595
        %1001 = vmatpush2.msra.mxu0 %v594
        %1002 = vmatprep.subr.mxu0 %v591
        %1003 = vmatpush2.msra.mxu0 %v590
        %1004 = vmatprep.subr.mxu0 %v587
        %1005 = vmatpush2.msra.mxu0 %v586
        %1006 = vmatprep.subr.mxu0 %v583
        %1007 = vmatpush2.msra.mxu0 %v582
        %1008 = vmatprep.subr.mxu0 %v579
        %1009 = vmatpush2.msra.mxu0 %v578
        %1010 = vmatprep.mubr.f32.mxu0 %v247
        %1011 = vmatmul.mubr.f32.gmra.mxu0 %v246
        %v1012 = vpop.f32.mrf.mxu0
        %v1013 = vadd.f32 %v936, %v1012
        %v1014 = vpop.f32.mrf.mxu0
        %v1015 = vadd.f32 %v938, %v1014
        %1016 = vmatprep.mubr.f32.mxu0 %v255
        %1017 = vmatmul.mubr.f32.gmra.mxu0 %v254
        %v1018 = vpop.f32.mrf.mxu0
        %v1019 = vadd.f32 %v942, %v1018
        %v1020 = vpop.f32.mrf.mxu0
        %v1021 = vadd.f32 %v944, %v1020
        %1022 = vdwg.mxu0
        %1023 = vmatprep.subr.mxu0 %v703
        %1024 = vmatpush1.msra.mxu0 %v702
        %1025 = vmatprep.subr.mxu0 %v699
        %1026 = vmatpush1.msra.mxu0 %v698
        %1027 = vmatprep.subr.mxu0 %v695
        %1028 = vmatpush1.msra.mxu0 %v694
        %1029 = vmatprep.subr.mxu0 %v691
        %1030 = vmatpush1.msra.mxu0 %v690
        %1031 = vmatprep.subr.mxu0 %v687
        %1032 = vmatpush1.msra.mxu0 %v686
        %1033 = vmatprep.subr.mxu0 %v683
        %1034 = vmatpush1.msra.mxu0 %v682
        %1035 = vmatprep.subr.mxu0 %v679
        %1036 = vmatpush1.msra.mxu0 %v678
        %1037 = vmatprep.subr.mxu0 %v675
        %1038 = vmatpush1.msra.mxu0 %v674
        %1039 = vmatprep.subr.mxu0 %v671
        %1040 = vmatpush1.msra.mxu0 %v670
        %1041 = vmatprep.subr.mxu0 %v667
        %1042 = vmatpush1.msra.mxu0 %v666
        %1043 = vmatprep.subr.mxu0 %v663
        %1044 = vmatpush1.msra.mxu0 %v662
        %1045 = vmatprep.subr.mxu0 %v659
        %1046 = vmatpush1.msra.mxu0 %v658
        %1047 = vmatprep.subr.mxu0 %v655
        %1048 = vmatpush1.msra.mxu0 %v654
        %1049 = vmatprep.subr.mxu0 %v651
        %1050 = vmatpush1.msra.mxu0 %v650
        %1051 = vmatprep.subr.mxu0 %v647
        %1052 = vmatpush1.msra.mxu0 %v646
        %1053 = vmatprep.subr.mxu0 %v643
        %1054 = vmatpush1.msra.mxu0 %v642
        %1055 = vmatprep.subr.mxu0 %v767
        %1056 = vmatpush2.msra.mxu0 %v766
        %1057 = vmatprep.subr.mxu0 %v763
        %1058 = vmatpush2.msra.mxu0 %v762
        %1059 = vmatprep.subr.mxu0 %v759
        %1060 = vmatpush2.msra.mxu0 %v758
        %1061 = vmatprep.subr.mxu0 %v755
        %1062 = vmatpush2.msra.mxu0 %v754
        %1063 = vmatprep.subr.mxu0 %v751
        %1064 = vmatpush2.msra.mxu0 %v750
        %1065 = vmatprep.subr.mxu0 %v747
        %1066 = vmatpush2.msra.mxu0 %v746
        %1067 = vmatprep.subr.mxu0 %v743
        %1068 = vmatpush2.msra.mxu0 %v742
        %1069 = vmatprep.subr.mxu0 %v739
        %1070 = vmatpush2.msra.mxu0 %v738
        %1071 = vmatprep.subr.mxu0 %v735
        %1072 = vmatpush2.msra.mxu0 %v734
        %1073 = vmatprep.subr.mxu0 %v731
        %1074 = vmatpush2.msra.mxu0 %v730
        %1075 = vmatprep.subr.mxu0 %v727
        %1076 = vmatpush2.msra.mxu0 %v726
        %1077 = vmatprep.subr.mxu0 %v723
        %1078 = vmatpush2.msra.mxu0 %v722
        %1079 = vmatprep.subr.mxu0 %v719
        %1080 = vmatpush2.msra.mxu0 %v718
        %1081 = vmatprep.subr.mxu0 %v715
        %1082 = vmatpush2.msra.mxu0 %v714
        %1083 = vmatprep.subr.mxu0 %v711
        %1084 = vmatpush2.msra.mxu0 %v710
        %1085 = vmatprep.subr.mxu0 %v707
        %1086 = vmatpush2.msra.mxu0 %v706
        %1087 = vmatprep.mubr.f32.mxu0 %v249
        %1088 = vmatmul.mubr.f32.gmra.mxu0 %v248
        %v1089 = vpop.f32.mrf.mxu0
        %v1090 = vadd.f32 %v1013, %v1089
        %v1091 = vpop.f32.mrf.mxu0
        %v1092 = vadd.f32 %v1015, %v1091
        %1093 = vmatprep.mubr.f32.mxu0 %v257
        %1094 = vmatmul.mubr.f32.gmra.mxu0 %v256
        %v1095 = vpop.f32.mrf.mxu0
        %v1096 = vadd.f32 %v1019, %v1095
        %v1097 = vpop.f32.mrf.mxu0
        %v1098 = vadd.f32 %v1021, %v1097
        %1099 = vdwg.mxu0
        %1100 = vmatprep.subr.mxu0 %v321
        %1101 = vmatpush1.msra.mxu0 %v320
        %1102 = vmatprep.subr.mxu0 %v317
        %1103 = vmatpush1.msra.mxu0 %v316
        %1104 = vmatprep.subr.mxu0 %v313
        %1105 = vmatpush1.msra.mxu0 %v312
        %1106 = vmatprep.subr.mxu0 %v309
        %1107 = vmatpush1.msra.mxu0 %v308
        %1108 = vmatprep.subr.mxu0 %v305
        %1109 = vmatpush1.msra.mxu0 %v304
        %1110 = vmatprep.subr.mxu0 %v301
        %1111 = vmatpush1.msra.mxu0 %v300
        %1112 = vmatprep.subr.mxu0 %v297
        %1113 = vmatpush1.msra.mxu0 %v296
        %1114 = vmatprep.subr.mxu0 %v293
        %1115 = vmatpush1.msra.mxu0 %v292
        %1116 = vmatprep.subr.mxu0 %v289
        %1117 = vmatpush1.msra.mxu0 %v288
        %1118 = vmatprep.subr.mxu0 %v285
        %1119 = vmatpush1.msra.mxu0 %v284
        %1120 = vmatprep.subr.mxu0 %v281
        %1121 = vmatpush1.msra.mxu0 %v280
        %1122 = vmatprep.subr.mxu0 %v277
        %1123 = vmatpush1.msra.mxu0 %v276
        %1124 = vmatprep.subr.mxu0 %v273
        %1125 = vmatpush1.msra.mxu0 %v272
        %1126 = vmatprep.subr.mxu0 %v269
        %1127 = vmatpush1.msra.mxu0 %v268
        %1128 = vmatprep.subr.mxu0 %v265
        %1129 = vmatpush1.msra.mxu0 %v264
        %1130 = vmatprep.subr.mxu0 %v261
        %1131 = vmatpush1.msra.mxu0 %v260
        %1132 = vmatprep.subr.mxu0 %v385
        %1133 = vmatpush2.msra.mxu0 %v384
        %1134 = vmatprep.subr.mxu0 %v381
        %1135 = vmatpush2.msra.mxu0 %v380
        %1136 = vmatprep.subr.mxu0 %v377
        %1137 = vmatpush2.msra.mxu0 %v376
        %1138 = vmatprep.subr.mxu0 %v373
        %1139 = vmatpush2.msra.mxu0 %v372
        %1140 = vmatprep.subr.mxu0 %v369
        %1141 = vmatpush2.msra.mxu0 %v368
        %1142 = vmatprep.subr.mxu0 %v365
        %1143 = vmatpush2.msra.mxu0 %v364
        %1144 = vmatprep.subr.mxu0 %v361
        %1145 = vmatpush2.msra.mxu0 %v360
        %1146 = vmatprep.subr.mxu0 %v357
        %1147 = vmatpush2.msra.mxu0 %v356
        %1148 = vmatprep.subr.mxu0 %v353
        %1149 = vmatpush2.msra.mxu0 %v352
        %1150 = vmatprep.subr.mxu0 %v349
        %1151 = vmatpush2.msra.mxu0 %v348
        %1152 = vmatprep.subr.mxu0 %v345
        %1153 = vmatpush2.msra.mxu0 %v344
        %1154 = vmatprep.subr.mxu0 %v341
        %1155 = vmatpush2.msra.mxu0 %v340
        %1156 = vmatprep.subr.mxu0 %v337
        %1157 = vmatpush2.msra.mxu0 %v336
        %1158 = vmatprep.subr.mxu0 %v333
        %1159 = vmatpush2.msra.mxu0 %v332
        %1160 = vmatprep.subr.mxu0 %v329
        %1161 = vmatpush2.msra.mxu0 %v328
        %1162 = vmatprep.subr.mxu0 %v325
        %1163 = vmatpush2.msra.mxu0 %v324
        %1164 = vmatprep.mubr.f32.mxu0 %v243
        %1165 = vmatmul.mubr.f32.gmra.mxu0 %v242
        %v1166 = vpop.f32.mrf.mxu0
        %v1167 = vadd.f32 %v783, %v1166
        %v1168 = vpop.f32.mrf.mxu0
        %v1169 = vadd.f32 %v787, %v1168
        %1170 = vmatprep.mubr.f32.mxu0 %v251
        %1171 = vmatmul.mubr.f32.gmra.mxu0 %v250
        %v1172 = vpop.f32.mrf.mxu0
        %v1173 = vadd.f32 %v783, %v1172
        %v1174 = vpop.f32.mrf.mxu0
        %v1175 = vadd.f32 %v787, %v1174
        %1176 = vdwg.mxu0
        %1177 = vmatprep.subr.mxu0 %v449
        %1178 = vmatpush1.msra.mxu0 %v448
        %1179 = vmatprep.subr.mxu0 %v445
        %1180 = vmatpush1.msra.mxu0 %v444
        %1181 = vmatprep.subr.mxu0 %v441
        %1182 = vmatpush1.msra.mxu0 %v440
        %1183 = vmatprep.subr.mxu0 %v437
        %1184 = vmatpush1.msra.mxu0 %v436
        %1185 = vmatprep.subr.mxu0 %v433
        %1186 = vmatpush1.msra.mxu0 %v432
        %1187 = vmatprep.subr.mxu0 %v429
        %1188 = vmatpush1.msra.mxu0 %v428
        %1189 = vmatprep.subr.mxu0 %v425
        %1190 = vmatpush1.msra.mxu0 %v424
        %1191 = vmatprep.subr.mxu0 %v421
        %1192 = vmatpush1.msra.mxu0 %v420
        %1193 = vmatprep.subr.mxu0 %v417
        %1194 = vmatpush1.msra.mxu0 %v416
        %1195 = vmatprep.subr.mxu0 %v413
        %1196 = vmatpush1.msra.mxu0 %v412
        %1197 = vmatprep.subr.mxu0 %v409
        %1198 = vmatpush1.msra.mxu0 %v408
        %1199 = vmatprep.subr.mxu0 %v405
        %1200 = vmatpush1.msra.mxu0 %v404
        %1201 = vmatprep.subr.mxu0 %v401
        %1202 = vmatpush1.msra.mxu0 %v400
        %1203 = vmatprep.subr.mxu0 %v397
        %1204 = vmatpush1.msra.mxu0 %v396
        %1205 = vmatprep.subr.mxu0 %v393
        %1206 = vmatpush1.msra.mxu0 %v392
        %1207 = vmatprep.subr.mxu0 %v389
        %1208 = vmatpush1.msra.mxu0 %v388
        %1209 = vmatprep.subr.mxu0 %v513
        %1210 = vmatpush2.msra.mxu0 %v512
        %1211 = vmatprep.subr.mxu0 %v509
        %1212 = vmatpush2.msra.mxu0 %v508
        %1213 = vmatprep.subr.mxu0 %v505
        %1214 = vmatpush2.msra.mxu0 %v504
        %1215 = vmatprep.subr.mxu0 %v501
        %1216 = vmatpush2.msra.mxu0 %v500
        %1217 = vmatprep.subr.mxu0 %v497
        %1218 = vmatpush2.msra.mxu0 %v496
        %1219 = vmatprep.subr.mxu0 %v493
        %1220 = vmatpush2.msra.mxu0 %v492
        %1221 = vmatprep.subr.mxu0 %v489
        %1222 = vmatpush2.msra.mxu0 %v488
        %1223 = vmatprep.subr.mxu0 %v485
        %1224 = vmatpush2.msra.mxu0 %v484
        %1225 = vmatprep.subr.mxu0 %v481
        %1226 = vmatpush2.msra.mxu0 %v480
        %1227 = vmatprep.subr.mxu0 %v477
        %1228 = vmatpush2.msra.mxu0 %v476
        %1229 = vmatprep.subr.mxu0 %v473
        %1230 = vmatpush2.msra.mxu0 %v472
        %1231 = vmatprep.subr.mxu0 %v469
        %1232 = vmatpush2.msra.mxu0 %v468
        %1233 = vmatprep.subr.mxu0 %v465
        %1234 = vmatpush2.msra.mxu0 %v464
        %1235 = vmatprep.subr.mxu0 %v461
        %1236 = vmatpush2.msra.mxu0 %v460
        %1237 = vmatprep.subr.mxu0 %v457
        %1238 = vmatpush2.msra.mxu0 %v456
        %1239 = vmatprep.subr.mxu0 %v453
        %1240 = vmatpush2.msra.mxu0 %v452
        %1241 = vmatprep.mubr.f32.mxu0 %v245
        %1242 = vmatmul.mubr.f32.gmra.mxu0 %v244
        %v1243 = vpop.f32.mrf.mxu0
        %v1244 = vadd.f32 %v1167, %v1243
        %v1245 = vpop.f32.mrf.mxu0
        %v1246 = vadd.f32 %v1169, %v1245
        %1247 = vmatprep.mubr.f32.mxu0 %v253
        %1248 = vmatmul.mubr.f32.gmra.mxu0 %v252
        %v1249 = vpop.f32.mrf.mxu0
        %v1250 = vadd.f32 %v1173, %v1249
        %v1251 = vpop.f32.mrf.mxu0
        %v1252 = vadd.f32 %v1175, %v1251
        %1253 = vdwg.mxu0
        %1254 = vmatprep.subr.mxu0 %v577
        %1255 = vmatpush1.msra.mxu0 %v576
        %1256 = vmatprep.subr.mxu0 %v573
        %1257 = vmatpush1.msra.mxu0 %v572
        %1258 = vmatprep.subr.mxu0 %v569
        %1259 = vmatpush1.msra.mxu0 %v568
        %1260 = vmatprep.subr.mxu0 %v565
        %1261 = vmatpush1.msra.mxu0 %v564
        %1262 = vmatprep.subr.mxu0 %v561
        %1263 = vmatpush1.msra.mxu0 %v560
        %1264 = vmatprep.subr.mxu0 %v557
        %1265 = vmatpush1.msra.mxu0 %v556
        %1266 = vmatprep.subr.mxu0 %v553
        %1267 = vmatpush1.msra.mxu0 %v552
        %1268 = vmatprep.subr.mxu0 %v549
        %1269 = vmatpush1.msra.mxu0 %v548
        %1270 = vmatprep.subr.mxu0 %v545
        %1271 = vmatpush1.msra.mxu0 %v544
        %1272 = vmatprep.subr.mxu0 %v541
        %1273 = vmatpush1.msra.mxu0 %v540
        %1274 = vmatprep.subr.mxu0 %v537
        %1275 = vmatpush1.msra.mxu0 %v536
        %1276 = vmatprep.subr.mxu0 %v533
        %1277 = vmatpush1.msra.mxu0 %v532
        %1278 = vmatprep.subr.mxu0 %v529
        %1279 = vmatpush1.msra.mxu0 %v528
        %1280 = vmatprep.subr.mxu0 %v525
        %1281 = vmatpush1.msra.mxu0 %v524
        %1282 = vmatprep.subr.mxu0 %v521
        %1283 = vmatpush1.msra.mxu0 %v520
        %1284 = vmatprep.subr.mxu0 %v517
        %1285 = vmatpush1.msra.mxu0 %v516
        %1286 = vmatprep.subr.mxu0 %v641
        %1287 = vmatpush2.msra.mxu0 %v640
        %1288 = vmatprep.subr.mxu0 %v637
        %1289 = vmatpush2.msra.mxu0 %v636
        %1290 = vmatprep.subr.mxu0 %v633
        %1291 = vmatpush2.msra.mxu0 %v632
        %1292 = vmatprep.subr.mxu0 %v629
        %1293 = vmatpush2.msra.mxu0 %v628
        %1294 = vmatprep.subr.mxu0 %v625
        %1295 = vmatpush2.msra.mxu0 %v624
        %1296 = vmatprep.subr.mxu0 %v621
        %1297 = vmatpush2.msra.mxu0 %v620
        %1298 = vmatprep.subr.mxu0 %v617
        %1299 = vmatpush2.msra.mxu0 %v616
        %1300 = vmatprep.subr.mxu0 %v613
        %1301 = vmatpush2.msra.mxu0 %v612
        %1302 = vmatprep.subr.mxu0 %v609
        %1303 = vmatpush2.msra.mxu0 %v608
        %1304 = vmatprep.subr.mxu0 %v605
        %1305 = vmatpush2.msra.mxu0 %v604
        %1306 = vmatprep.subr.mxu0 %v601
        %1307 = vmatpush2.msra.mxu0 %v600
        %1308 = vmatprep.subr.mxu0 %v597
        %1309 = vmatpush2.msra.mxu0 %v596
        %1310 = vmatprep.subr.mxu0 %v593
        %1311 = vmatpush2.msra.mxu0 %v592
        %1312 = vmatprep.subr.mxu0 %v589
        %1313 = vmatpush2.msra.mxu0 %v588
        %1314 = vmatprep.subr.mxu0 %v585
        %1315 = vmatpush2.msra.mxu0 %v584
        %1316 = vmatprep.subr.mxu0 %v581
        %1317 = vmatpush2.msra.mxu0 %v580
        %1318 = vmatprep.mubr.f32.mxu0 %v247
        %1319 = vmatmul.mubr.f32.gmra.mxu0 %v246
        %v1320 = vpop.f32.mrf.mxu0
        %v1321 = vadd.f32 %v1244, %v1320
        %v1322 = vpop.f32.mrf.mxu0
        %v1323 = vadd.f32 %v1246, %v1322
        %1324 = vmatprep.mubr.f32.mxu0 %v255
        %1325 = vmatmul.mubr.f32.gmra.mxu0 %v254
        %v1326 = vpop.f32.mrf.mxu0
        %v1327 = vadd.f32 %v1250, %v1326
        %v1328 = vpop.f32.mrf.mxu0
        %v1329 = vadd.f32 %v1252, %v1328
        %1330 = vdwg.mxu0
        %1331 = vmatprep.subr.mxu0 %v705
        %1332 = vmatpush1.msra.mxu0 %v704
        %1333 = vmatprep.subr.mxu0 %v701
        %1334 = vmatpush1.msra.mxu0 %v700
        %1335 = vmatprep.subr.mxu0 %v697
        %1336 = vmatpush1.msra.mxu0 %v696
        %1337 = vmatprep.subr.mxu0 %v693
        %1338 = vmatpush1.msra.mxu0 %v692
        %1339 = vmatprep.subr.mxu0 %v689
        %1340 = vmatpush1.msra.mxu0 %v688
        %1341 = vmatprep.subr.mxu0 %v685
        %1342 = vmatpush1.msra.mxu0 %v684
        %1343 = vmatprep.subr.mxu0 %v681
        %1344 = vmatpush1.msra.mxu0 %v680
        %1345 = vmatprep.subr.mxu0 %v677
        %1346 = vmatpush1.msra.mxu0 %v676
        %1347 = vmatprep.subr.mxu0 %v673
        %1348 = vmatpush1.msra.mxu0 %v672
        %1349 = vmatprep.subr.mxu0 %v669
        %1350 = vmatpush1.msra.mxu0 %v668
        %1351 = vmatprep.subr.mxu0 %v665
        %1352 = vmatpush1.msra.mxu0 %v664
        %1353 = vmatprep.subr.mxu0 %v661
        %1354 = vmatpush1.msra.mxu0 %v660
        %1355 = vmatprep.subr.mxu0 %v657
        %1356 = vmatpush1.msra.mxu0 %v656
        %1357 = vmatprep.subr.mxu0 %v653
        %1358 = vmatpush1.msra.mxu0 %v652
        %1359 = vmatprep.subr.mxu0 %v649
        %1360 = vmatpush1.msra.mxu0 %v648
        %1361 = vmatprep.subr.mxu0 %v645
        %1362 = vmatpush1.msra.mxu0 %v644
        %1363 = vmatprep.subr.mxu0 %v769
        %1364 = vmatpush2.msra.mxu0 %v768
        %1365 = vmatprep.subr.mxu0 %v765
        %1366 = vmatpush2.msra.mxu0 %v764
        %1367 = vmatprep.subr.mxu0 %v761
        %1368 = vmatpush2.msra.mxu0 %v760
        %1369 = vmatprep.subr.mxu0 %v757
        %1370 = vmatpush2.msra.mxu0 %v756
        %1371 = vmatprep.subr.mxu0 %v753
        %1372 = vmatpush2.msra.mxu0 %v752
        %1373 = vmatprep.subr.mxu0 %v749
        %1374 = vmatpush2.msra.mxu0 %v748
        %1375 = vmatprep.subr.mxu0 %v745
        %1376 = vmatpush2.msra.mxu0 %v744
        %1377 = vmatprep.subr.mxu0 %v741
        %1378 = vmatpush2.msra.mxu0 %v740
        %1379 = vmatprep.subr.mxu0 %v737
        %1380 = vmatpush2.msra.mxu0 %v736
        %1381 = vmatprep.subr.mxu0 %v733
        %1382 = vmatpush2.msra.mxu0 %v732
        %1383 = vmatprep.subr.mxu0 %v729
        %1384 = vmatpush2.msra.mxu0 %v728
        %1385 = vmatprep.subr.mxu0 %v725
        %1386 = vmatpush2.msra.mxu0 %v724
        %1387 = vmatprep.subr.mxu0 %v721
        %1388 = vmatpush2.msra.mxu0 %v720
        %1389 = vmatprep.subr.mxu0 %v717
        %1390 = vmatpush2.msra.mxu0 %v716
        %1391 = vmatprep.subr.mxu0 %v713
        %1392 = vmatpush2.msra.mxu0 %v712
        %1393 = vmatprep.subr.mxu0 %v709
        %1394 = vmatpush2.msra.mxu0 %v708
        %1395 = vmatprep.mubr.f32.mxu0 %v249
        %1396 = vmatmul.mubr.f32.gmra.mxu0 %v248
        %v1397 = vpop.f32.mrf.mxu0
        %v1398 = vadd.f32 %v1321, %v1397
        %v1399 = vpop.f32.mrf.mxu0
        %v1400 = vadd.f32 %v1323, %v1399
        %1401 = vmatprep.mubr.f32.mxu0 %v257
        %1402 = vmatmul.mubr.f32.gmra.mxu0 %v256
        %v1403 = vpop.f32.mrf.mxu0
        %v1404 = vadd.f32 %v1327, %v1403
        %v1405 = vpop.f32.mrf.mxu0
        %v1406 = vadd.f32 %v1329, %v1405
        %1407 = vdwg.mxu0
        %1408 = vst [vmem:[%s238] sm:$0xff] %v1090
        %1409 = vst [vmem:[%s238 + $0x8] sm:$0xff] %v1092
        %1410 = vst [vmem:[%s238 + $0x10] sm:$0xff] %v1398
        %1411 = vst [vmem:[%s238 + $0x18] sm:$0xff] %v1400
        %1412 = vst [vmem:[%s238 + $0x20] sm:$0xff] %v1096
        %1413 = vst [vmem:[%s238 + $0x28] sm:$0xff] %v1098
        %1414 = vst [vmem:[%s238 + $0x30] sm:$0xff] %v1404
        %1415 = vst [vmem:[%s238 + $0x38] sm:$0xff] %v1406
        %s1416 = sand.u32 %s102, 1
        %s1417 = scalar_lea.sflag [#allocation4], %s1416
        %s1418 = sand.u32 %s102, 1
        %s1419 = smul.addr %s1418, 64
        %s1420 = scalar_lea.vmem [#allocation8], %s1419
        // Predicated region
        $region45: #{tpu_custom_call.1} parent=31 // pred_check
          %p1421 = pneg %p112
        $region46: #{tpu_custom_call.1} parent=31 // pred_check_branch
          %1423 = sbr.rel (%p1421) target = $region48
        $region47: #{tpu_custom_call.1} parent=31 // pred_region
          %s1424 = smul.u32 4, %s21
          %s1426 = ssub.s32 1024, 1024
          %1427 = vsyncadd %s1417, %s1426
          %s1428 = smul.addr %s1424, 128
          %s1429 = scalar_lea.hbm %s3, %s1428
          %s1430 = sshll.u32 %s1420, 4
          %s1431 = int_to_ptr.vmem [resolvable:$true] %s1430
          %1436 = dma.vmem_to_hbm [thread:$0]  %s1431, 1024, %s1429, %s1417, 512, 1024, 32
        $region48: #{tpu_custom_call.1} parent=31 // pred_fallthru
          _
      $region32: #{tpu_custom_call.1} parent=5 // pred_fallthru
        _
      %p1437 = scmp.le.s32.totalorder 2, %s16
      // Predicated region
      $region49: #{tpu_custom_call.1} parent=5 // pred_check
        %p1438 = pneg %p1437
      $region50: #{tpu_custom_call.1} parent=5 // pred_check_branch
        %1440 = sbr.rel (%p1438) target = $region52
      $region51: #{tpu_custom_call.1} parent=5 // pred_region
        %s1441 = ssub.s32 %s16, 2
        // Predicated region
        $region53: #{tpu_custom_call.1} parent=51 // pred_check
          %p1442 = pneg %p118
        $region54: #{tpu_custom_call.1} parent=51 // pred_check_branch
          %1444 = sbr.rel (%p1442) target = $region56
        $region55: #{tpu_custom_call.1} parent=51 // pred_region
          %s1445 = sand.u32 %s103, 1
          %s1446 = scalar_lea.sflag [#allocation4], %s1445
          %s1447 = sand.u32 %s103, 1
          %s1448 = smul.addr %s1447, 64
          %s1449 = scalar_lea.vmem [#allocation8], %s1448
          %1450 = dma.done %s1446, 1024
        $region56: #{tpu_custom_call.1} parent=51 // pred_fallthru
          _
      $region52: #{tpu_custom_call.1} parent=5 // pred_fallthru
        _
    $region6: #{tpu_custom_call.1} parent=1 // loop_footer
      %s20 = sadd.s32 1, %s16
    $region7: #{tpu_custom_call.1} parent=1 // loop_footer_branch
      %15 = sbr.rel target = $region3
    $region8: #{tpu_custom_call.1} parent=1 // loop_exit
      _
    %1451 = vsyncpa [#allocation3], 1
    %s1452 = scalar_lea.sflag [#allocation3], 1
    %1453 = vsyncpa %s1452, 1
    %1454 = vsyncpa [#allocation6], 1
    %s1455 = scalar_lea.sflag [#allocation6], 1
    %1456 = vsyncpa %s1455, 1
    %1457 = vsyncpa [#allocation4], 1
    %s1458 = scalar_lea.sflag [#allocation4], 1
    %1459 = vsyncpa %s1458, 1

</llo_original>
